<compile_context>
chip_gen: v6e
topology: v6e:2x2x1
jax: 0.10.0
libtpu: 0.0.40
codegen_flags: <defaults>
</compile_context>

<pallas_src>
import jax
import jax.numpy as jnp
from jax.experimental import pallas as pl
from jax.experimental.pallas import tpu as pltpu

EPS = 1e-5


def _conv1x1_bn_kernel(x_ref, w_ref, gamma_ref, beta_ref, o_ref):
    # x_ref:     (Cin, M)   f32  -- cast to bf16 in-kernel (rides under DMA/compute)
    # w_ref:     (Cout, Cin) bf16 -- pre-formatted once at init
    # gamma_ref: (Cout, 1)  f32
    # beta_ref:  (Cout, 1)  f32
    # o_ref:     (Cout, M)  f32
    x_bf16 = x_ref[...].astype(jnp.bfloat16)

    # 1x1 conv == channel matmul on the MXU, f32 accumulation.
    y = jnp.dot(w_ref[...], x_bf16, preferred_element_type=jnp.float32)  # (Cout, M)

    # BatchNorm (training mode), single pass over y:
    #   mean = sum(y)/M ; var = sum(y*y)/M - mean^2 (biased)
    m = jnp.float32(y.shape[1])
    s = jnp.sum(y, axis=1, keepdims=True)            # (Cout, 1)
    ss = jnp.sum(y * y, axis=1, keepdims=True)       # (Cout, 1)
    mean = s / m
    var = ss / m - mean * mean
    scale = gamma_ref[...] * jax.lax.rsqrt(var + EPS)   # EUP rsqrt
    shift = beta_ref[...] - mean * scale

    o_ref[...] = (y * scale + shift).astype(o_ref.dtype)


def prepare_params(weight_oihw, gamma, beta):
    """One-time parameter formatting (outside the per-call path)."""
    Cout, Cin = weight_oihw.shape[0], weight_oihw.shape[1]
    w_mat = weight_oihw.reshape(Cout, Cin).astype(jnp.bfloat16)      # (Cout, Cin) bf16
    gamma2 = gamma.astype(jnp.float32).reshape(Cout, 1)              # (Cout, 1)  f32
    beta2 = beta.astype(jnp.float32).reshape(Cout, 1)                # (Cout, 1)  f32
    return w_mat, gamma2, beta2


@jax.jit
def conv1x1_batchnorm(x_nchw, w_mat, gamma2, beta2):
    """x_nchw: (N, Cin, H, W) f32; w_mat: (Cout, Cin) bf16; gamma2/beta2: (Cout, 1) f32."""
    N, Cin, H, W = x_nchw.shape
    Cout = w_mat.shape[0]
    M = N * H * W

    # NCHW -> (Cin, M).  For N == 1 (the module's shape) this is a free reshape.
    if N == 1:
        x_cm = x_nchw.reshape(Cin, M)
    else:
        x_cm = jnp.transpose(x_nchw, (1, 0, 2, 3)).reshape(Cin, M)

    out_cm = pl.pallas_call(
        _conv1x1_bn_kernel,
        out_shape=jax.ShapeDtypeStruct((Cout, M), jnp.float32),
        grid_spec=pltpu.PrefetchScalarGridSpec(
            num_scalar_prefetch=0,
            grid=(1,),                                   # single step: ~1.6 MB total, VMEM-resident
            in_specs=[
                pl.BlockSpec((Cin, M), lambda i: (0, 0)),      # x (f32, full array)
                pl.BlockSpec((Cout, Cin), lambda i: (0, 0)),   # weight (bf16, full array)
                pl.BlockSpec((Cout, 1), lambda i: (0, 0)),     # gamma
                pl.BlockSpec((Cout, 1), lambda i: (0, 0)),     # beta
            ],
            out_specs=pl.BlockSpec((Cout, M), lambda i: (0, 0)),
        ),
        compiler_params=pltpu.CompilerParams(
            dimension_semantics=("arbitrary",),
        ),
    )(x_cm, w_mat, gamma2, beta2)

    # (Cout, M) -> NCHW (free reshape for N == 1).
    if N == 1:
        return out_cm.reshape(1, Cout, H, W)
    return jnp.transpose(out_cm.reshape(Cout, N, H, W), (1, 0, 2, 3))


def _reference(x_nchw, weight_oihw, gamma, beta):
    # Pure-JAX float32 reference for correctness sanity check.
    N, Cin, H, W = x_nchw.shape
    Cout = weight_oihw.shape[0]
    xf = jnp.transpose(x_nchw, (0, 2, 3, 1)).reshape(-1, Cin)
    wf = weight_oihw.reshape(Cout, Cin).T
    y = xf @ wf
    mean = y.mean(axis=0, keepdims=True)
    var = ((y - mean) ** 2).mean(axis=0, keepdims=True)
    y = (y - mean) / jnp.sqrt(var + EPS) * gamma[None, :] + beta[None, :]
    return jnp.transpose(y.reshape(N, H, W, Cout), (0, 3, 1, 2))


if __name__ == "__main__":
    key = jax.random.PRNGKey(0)
    k_x, k_w, k_g, k_b = jax.random.split(key, 4)

    # Shapes implied by the module's forward: (1, 1200, 14, 14) -> (1, 200, 14, 14)
    N, Cin, Cout, H, W = 1, 1200, 200, 14, 14

    x = jax.random.normal(k_x, (N, Cin, H, W), dtype=jnp.float32)
    # Deterministic synthetic parameters (Conv2d weight, BN affine params).
    weight = jax.random.normal(k_w, (Cout, Cin, 1, 1), dtype=jnp.float32) * 0.02
    gamma = 1.0 + 0.1 * jax.random.normal(k_g, (Cout,), dtype=jnp.float32)
    beta = 0.1 * jax.random.normal(k_b, (Cout,), dtype=jnp.float32)

    # One-time parameter formatting (kept out of the per-call path).
    w_mat, gamma2, beta2 = prepare_params(weight, gamma, beta)

    out = conv1x1_batchnorm(x, w_mat, gamma2, beta2)
    out = jax.block_until_ready(out)

    ref = _reference(x, weight, gamma, beta)
    assert out.shape == (N, Cout, H, W)
    # bf16 matmul inputs (f32 accumulation) -> loosened tolerance.
    max_err = float(jnp.max(jnp.abs(out - ref)))
    assert jnp.allclose(out, ref, atol=3e-2, rtol=3e-2), f"max_err={max_err}"

    print("KERNEL_OK")
</pallas_src>

<mosaic_0001>
module attributes {stable_mosaic.version = 11 : i64} {
  func.func @_conv1x1_bn_kernel(%arg0: i32, %arg1: memref<1200x196xf32, #tpu.memory_space<vmem>>, %arg2: memref<200x1200xbf16, #tpu.memory_space<vmem>>, %arg3: memref<200x1xf32, #tpu.memory_space<vmem>>, %arg4: memref<200x1xf32, #tpu.memory_space<vmem>>, %arg5: memref<200x196xf32, #tpu.memory_space<vmem>>) attributes {dimension_semantics = [#tpu.dimension_semantics<arbitrary>], iteration_bounds = array<i64: 1>, scalar_prefetch = 0 : i64, scratch_operands = 0 : i64, tpu.core_type = #tpu.core_type<tc>, window_params = [{pipeline_mode = #tpu.pipeline_mode<synchronous>, transform_indices = @transform_0, window_bounds = array<i64: 1200, 196>}, {pipeline_mode = #tpu.pipeline_mode<synchronous>, transform_indices = @transform_1, window_bounds = array<i64: 200, 1200>}, {pipeline_mode = #tpu.pipeline_mode<synchronous>, transform_indices = @transform_2, window_bounds = array<i64: 200, 1>}, {pipeline_mode = #tpu.pipeline_mode<synchronous>, transform_indices = @transform_3, window_bounds = array<i64: 200, 1>}, {pipeline_mode = #tpu.pipeline_mode<synchronous>, transform_indices = @transform_4, window_bounds = array<i64: 200, 196>}]} {
    %c0 = arith.constant 0 : index
    %c0_0 = arith.constant 0 : index
    %0 = vector.load %arg1[%c0, %c0_0] : memref<1200x196xf32, #tpu.memory_space<vmem>>, vector<1200x196xf32>
    %1 = arith.truncf %0 : vector<1200x196xf32> to vector<1200x196xbf16>
    %c0_1 = arith.constant 0 : index
    %c0_2 = arith.constant 0 : index
    %2 = vector.load %arg2[%c0_1, %c0_2] : memref<200x1200xbf16, #tpu.memory_space<vmem>>, vector<200x1200xbf16>
    %cst = arith.constant dense<0.000000e+00> : vector<200x196xf32>
    %3 = tpu.matmul %2, %1, %cst {dimension_numbers = #tpu.dot_dimension_numbers<[1], [0], [0], [1], [0, 0, 1, 1], [], []>} : vector<200x1200xbf16>, vector<1200x196xbf16>, vector<200x196xf32> -> vector<200x196xf32>
    %cst_3 = arith.constant dense<0.000000e+00> : vector<200xf32>
    %4 = vector.multi_reduction <add>, %3, %cst_3 [1] : vector<200x196xf32> to vector<200xf32>
    %5 = vector.shape_cast %4 : vector<200xf32> to vector<200x1xf32>
    %6 = arith.mulf %3, %3 : vector<200x196xf32>
    %cst_4 = arith.constant dense<0.000000e+00> : vector<200xf32>
    %7 = vector.multi_reduction <add>, %6, %cst_4 [1] : vector<200x196xf32> to vector<200xf32>
    %8 = vector.shape_cast %7 : vector<200xf32> to vector<200x1xf32>
    %cst_5 = arith.constant 1.960000e+02 : f32
    %9 = vector.broadcast %cst_5 : f32 to vector<200x1xf32>
    %10 = arith.divf %5, %9 : vector<200x1xf32>
    %cst_6 = arith.constant 1.960000e+02 : f32
    %11 = vector.broadcast %cst_6 : f32 to vector<200x1xf32>
    %12 = arith.divf %8, %11 : vector<200x1xf32>
    %13 = arith.mulf %10, %10 : vector<200x1xf32>
    %14 = arith.subf %12, %13 : vector<200x1xf32>
    %c0_7 = arith.constant 0 : index
    %c0_8 = arith.constant 0 : index
    %15 = vector.load %arg3[%c0_7, %c0_8] : memref<200x1xf32, #tpu.memory_space<vmem>>, vector<200x1xf32>
    %cst_9 = arith.constant 9.99999974E-6 : f32
    %16 = vector.broadcast %cst_9 : f32 to vector<200x1xf32>
    %17 = arith.addf %14, %16 : vector<200x1xf32>
    %18 = math.rsqrt %17 : vector<200x1xf32>
    %19 = arith.mulf %15, %18 : vector<200x1xf32>
    %c0_10 = arith.constant 0 : index
    %c0_11 = arith.constant 0 : index
    %20 = vector.load %arg4[%c0_10, %c0_11] : memref<200x1xf32, #tpu.memory_space<vmem>>, vector<200x1xf32>
    %21 = arith.mulf %10, %19 : vector<200x1xf32>
    %22 = arith.subf %20, %21 : vector<200x1xf32>
    %23 = vector.broadcast %19 : vector<200x1xf32> to vector<200x196xf32>
    %24 = arith.mulf %3, %23 : vector<200x196xf32>
    %25 = vector.broadcast %22 : vector<200x1xf32> to vector<200x196xf32>
    %26 = arith.addf %24, %25 : vector<200x196xf32>
    %c0_12 = arith.constant 0 : index
    %c0_13 = arith.constant 0 : index
    %27 = vector.load %arg5[%c0_12, %c0_13] : memref<200x196xf32, #tpu.memory_space<vmem>>, vector<200x196xf32>
    tpu.vector_store %arg5[%c0_12, %c0_13], %26 {strides = array<i32>} : memref<200x196xf32, #tpu.memory_space<vmem>>, vector<200x196xf32>,
    return
  }
  func.func @transform_0(%arg0: i32) -> (i32, i32) {
    %c0_i32 = arith.constant 0 : i32
    %c0_i32_0 = arith.constant 0 : i32
    %c0_i32_1 = arith.constant 0 : i32
    return %c0_i32, %c0_i32_0 : i32, i32
  }
  func.func @transform_1(%arg0: i32) -> (i32, i32) {
    %c0_i32 = arith.constant 0 : i32
    %c0_i32_0 = arith.constant 0 : i32
    %c0_i32_1 = arith.constant 0 : i32
    return %c0_i32, %c0_i32_0 : i32, i32
  }
  func.func @transform_2(%arg0: i32) -> (i32, i32) {
    %c0_i32 = arith.constant 0 : i32
    %c0_i32_0 = arith.constant 0 : i32
    %c0_i32_1 = arith.constant 0 : i32
    return %c0_i32, %c0_i32_0 : i32, i32
  }
  func.func @transform_3(%arg0: i32) -> (i32, i32) {
    %c0_i32 = arith.constant 0 : i32
    %c0_i32_0 = arith.constant 0 : i32
    %c0_i32_1 = arith.constant 0 : i32
    return %c0_i32, %c0_i32_0 : i32, i32
  }
  func.func @transform_4(%arg0: i32) -> (i32, i32) {
    %c0_i32 = arith.constant 0 : i32
    %c0_i32_0 = arith.constant 0 : i32
    %c0_i32_1 = arith.constant 0 : i32
    return %c0_i32, %c0_i32_0 : i32, i32
  }
}

</mosaic_0001>

<llo_original>
// kernel: conv1x1_batchnorm.1
$region0: #{conv1x1_batchnorm.1}
  #allocation0 [shape = 'u32[]', space=smem, size = 0x4, offset = 0x4, fixed_abs, tag = 'smem constant byte address 0x4 - core index']
  #allocation1 [shape = 'u32[144,128]{1,0:T(1,128)}', space=vmem, size = 0x12000, scoped, tag = 'internal scratch']
  %s0 = inlined_call_operand.vmem [shape: f32[1200,196], index: 0, kind: input, shape index: {}]
  %s1 = inlined_call_operand.vmem [shape: bf16[200,1200], index: 1, kind: input, shape index: {}]
  %s2 = inlined_call_operand.vmem [shape: f32[200,1], index: 2, kind: input, shape index: {}]
  %s3 = inlined_call_operand.vmem [shape: f32[200,1], index: 3, kind: input, shape index: {}]
  %s4 = inlined_call_operand.vmem [shape: f32[200,196], index: 4, kind: output, shape index: {}]
  %s5 = sld [smem:[#allocation0]]
  $region26: #{conv1x1_batchnorm.1} parent=0
    _
  %s7 = ssub.s32 1, %s5
  %s8 = scalar_select 0, %s7, %s5
  // Predicated region
  $region2: #{conv1x1_batchnorm.1} parent=0 // pred_check
    _
  $region3: #{conv1x1_batchnorm.1} parent=0 // pred_check_branch
    %10 = sbr.rel (0) target = $region5
  $region4: #{conv1x1_batchnorm.1} parent=0 // pred_region
    _
  $region5: #{conv1x1_batchnorm.1} parent=0 // pred_fallthru
    _
  // Predicated region
  $region6: #{conv1x1_batchnorm.1} parent=0 // pred_check
    _
  $region7: #{conv1x1_batchnorm.1} parent=0 // pred_check_branch
    %12 = sbr.rel (0) target = $region9
  $region8: #{conv1x1_batchnorm.1} parent=0 // pred_region
    _
  $region9: #{conv1x1_batchnorm.1} parent=0 // pred_fallthru
    _
  // Predicated region
  $region10: #{conv1x1_batchnorm.1} parent=0 // pred_check
    _
  $region11: #{conv1x1_batchnorm.1} parent=0 // pred_check_branch
    %14 = sbr.rel (0) target = $region13
  $region12: #{conv1x1_batchnorm.1} parent=0 // pred_region
    _
  $region13: #{conv1x1_batchnorm.1} parent=0 // pred_fallthru
    _
  // Predicated region
  $region14: #{conv1x1_batchnorm.1} parent=0 // pred_check
    _
  $region15: #{conv1x1_batchnorm.1} parent=0 // pred_check_branch
    %16 = sbr.rel (0) target = $region17
  $region16: #{conv1x1_batchnorm.1} parent=0 // pred_region
    _
  $region17: #{conv1x1_batchnorm.1} parent=0 // pred_fallthru
    _
  %v18 = vld [vmem:[%s0] sm:$0xff]
  %v19 = vld [vmem:[%s0 + $0x8] sm:$0xff]
  %v20 = vld [vmem:[%s0 + $0x10] sm:$0xff]
  %v21 = vld [vmem:[%s0 + $0x18] sm:$0xff]
  %v22 = vld [vmem:[%s0 + $0x20] sm:$0xff]
  %v23 = vld [vmem:[%s0 + $0x28] sm:$0xff]
  %v24 = vld [vmem:[%s0 + $0x30] sm:$0xff]
  %v25 = vld [vmem:[%s0 + $0x38] sm:$0xff]
  %v26 = vld [vmem:[%s0 + $0x40] sm:$0xff]
  %v27 = vld [vmem:[%s0 + $0x48] sm:$0xff]
  %v28 = vld [vmem:[%s0 + $0x50] sm:$0xff]
  %v29 = vld [vmem:[%s0 + $0x58] sm:$0xff]
  %v30 = vld [vmem:[%s0 + $0x60] sm:$0xff]
  %v31 = vld [vmem:[%s0 + $0x68] sm:$0xff]
  %v32 = vld [vmem:[%s0 + $0x70] sm:$0xff]
  %v33 = vld [vmem:[%s0 + $0x78] sm:$0xff]
  %v34 = vld [vmem:[%s0 + $0x80] sm:$0xff]
  %v35 = vld [vmem:[%s0 + $0x88] sm:$0xff]
  %v36 = vld [vmem:[%s0 + $0x90] sm:$0xff]
  %v37 = vld [vmem:[%s0 + $0x98] sm:$0xff]
  %v38 = vld [vmem:[%s0 + $0xa0] sm:$0xff]
  %v39 = vld [vmem:[%s0 + $0xa8] sm:$0xff]
  %v40 = vld [vmem:[%s0 + $0xb0] sm:$0xff]
  %v41 = vld [vmem:[%s0 + $0xb8] sm:$0xff]
  %v42 = vld [vmem:[%s0 + $0xc0] sm:$0xff]
  %v43 = vld [vmem:[%s0 + $0xc8] sm:$0xff]
  %v44 = vld [vmem:[%s0 + $0xd0] sm:$0xff]
  %v45 = vld [vmem:[%s0 + $0xd8] sm:$0xff]
  %v46 = vld [vmem:[%s0 + $0xe0] sm:$0xff]
  %v47 = vld [vmem:[%s0 + $0xe8] sm:$0xff]
  %v48 = vld [vmem:[%s0 + $0xf0] sm:$0xff]
  %v49 = vld [vmem:[%s0 + $0xf8] sm:$0xff]
  %v50 = vld [vmem:[%s0 + $0x100] sm:$0xff]
  %v51 = vld [vmem:[%s0 + $0x108] sm:$0xff]
  %v52 = vld [vmem:[%s0 + $0x110] sm:$0xff]
  %v53 = vld [vmem:[%s0 + $0x118] sm:$0xff]
  %v54 = vld [vmem:[%s0 + $0x120] sm:$0xff]
  %v55 = vld [vmem:[%s0 + $0x128] sm:$0xff]
  %v56 = vld [vmem:[%s0 + $0x130] sm:$0xff]
  %v57 = vld [vmem:[%s0 + $0x138] sm:$0xff]
  %v58 = vld [vmem:[%s0 + $0x140] sm:$0xff]
  %v59 = vld [vmem:[%s0 + $0x148] sm:$0xff]
  %v60 = vld [vmem:[%s0 + $0x150] sm:$0xff]
  %v61 = vld [vmem:[%s0 + $0x158] sm:$0xff]
  %v62 = vld [vmem:[%s0 + $0x160] sm:$0xff]
  %v63 = vld [vmem:[%s0 + $0x168] sm:$0xff]
  %v64 = vld [vmem:[%s0 + $0x170] sm:$0xff]
  %v65 = vld [vmem:[%s0 + $0x178] sm:$0xff]
  %v66 = vld [vmem:[%s0 + $0x180] sm:$0xff]
  %v67 = vld [vmem:[%s0 + $0x188] sm:$0xff]
  %v68 = vld [vmem:[%s0 + $0x190] sm:$0xff]
  %v69 = vld [vmem:[%s0 + $0x198] sm:$0xff]
  %v70 = vld [vmem:[%s0 + $0x1a0] sm:$0xff]
  %v71 = vld [vmem:[%s0 + $0x1a8] sm:$0xff]
  %v72 = vld [vmem:[%s0 + $0x1b0] sm:$0xff]
  %v73 = vld [vmem:[%s0 + $0x1b8] sm:$0xff]
  %v74 = vld [vmem:[%s0 + $0x1c0] sm:$0xff]
  %v75 = vld [vmem:[%s0 + $0x1c8] sm:$0xff]
  %v76 = vld [vmem:[%s0 + $0x1d0] sm:$0xff]
  %v77 = vld [vmem:[%s0 + $0x1d8] sm:$0xff]
  %v78 = vld [vmem:[%s0 + $0x1e0] sm:$0xff]
  %v79 = vld [vmem:[%s0 + $0x1e8] sm:$0xff]
  %v80 = vld [vmem:[%s0 + $0x1f0] sm:$0xff]
  %v81 = vld [vmem:[%s0 + $0x1f8] sm:$0xff]
  %v82 = vld [vmem:[%s0 + $0x200] sm:$0xff]
  %v83 = vld [vmem:[%s0 + $0x208] sm:$0xff]
  %v84 = vld [vmem:[%s0 + $0x210] sm:$0xff]
  %v85 = vld [vmem:[%s0 + $0x218] sm:$0xff]
  %v86 = vld [vmem:[%s0 + $0x220] sm:$0xff]
  %v87 = vld [vmem:[%s0 + $0x228] sm:$0xff]
  %v88 = vld [vmem:[%s0 + $0x230] sm:$0xff]
  %v89 = vld [vmem:[%s0 + $0x238] sm:$0xff]
  %v90 = vld [vmem:[%s0 + $0x240] sm:$0xff]
  %v91 = vld [vmem:[%s0 + $0x248] sm:$0xff]
  %v92 = vld [vmem:[%s0 + $0x250] sm:$0xff]
  %v93 = vld [vmem:[%s0 + $0x258] sm:$0xff]
  %v94 = vld [vmem:[%s0 + $0x260] sm:$0xff]
  %v95 = vld [vmem:[%s0 + $0x268] sm:$0xff]
  %v96 = vld [vmem:[%s0 + $0x270] sm:$0xff]
  %v97 = vld [vmem:[%s0 + $0x278] sm:$0xff]
  %v98 = vld [vmem:[%s0 + $0x280] sm:$0xff]
  %v99 = vld [vmem:[%s0 + $0x288] sm:$0xff]
  %v100 = vld [vmem:[%s0 + $0x290] sm:$0xff]
  %v101 = vld [vmem:[%s0 + $0x298] sm:$0xff]
  %v102 = vld [vmem:[%s0 + $0x2a0] sm:$0xff]
  %v103 = vld [vmem:[%s0 + $0x2a8] sm:$0xff]
  %v104 = vld [vmem:[%s0 + $0x2b0] sm:$0xff]
  %v105 = vld [vmem:[%s0 + $0x2b8] sm:$0xff]
  %v106 = vld [vmem:[%s0 + $0x2c0] sm:$0xff]
  %v107 = vld [vmem:[%s0 + $0x2c8] sm:$0xff]
  %v108 = vld [vmem:[%s0 + $0x2d0] sm:$0xff]
  %v109 = vld [vmem:[%s0 + $0x2d8] sm:$0xff]
  %v110 = vld [vmem:[%s0 + $0x2e0] sm:$0xff]
  %v111 = vld [vmem:[%s0 + $0x2e8] sm:$0xff]
  %v112 = vld [vmem:[%s0 + $0x2f0] sm:$0xff]
  %v113 = vld [vmem:[%s0 + $0x2f8] sm:$0xff]
  %v114 = vld [vmem:[%s0 + $0x300] sm:$0xff]
  %v115 = vld [vmem:[%s0 + $0x308] sm:$0xff]
  %v116 = vld [vmem:[%s0 + $0x310] sm:$0xff]
  %v117 = vld [vmem:[%s0 + $0x318] sm:$0xff]
  %v118 = vld [vmem:[%s0 + $0x320] sm:$0xff]
  %v119 = vld [vmem:[%s0 + $0x328] sm:$0xff]
  %v120 = vld [vmem:[%s0 + $0x330] sm:$0xff]
  %v121 = vld [vmem:[%s0 + $0x338] sm:$0xff]
  %v122 = vld [vmem:[%s0 + $0x340] sm:$0xff]
  %v123 = vld [vmem:[%s0 + $0x348] sm:$0xff]
  %v124 = vld [vmem:[%s0 + $0x350] sm:$0xff]
  %v125 = vld [vmem:[%s0 + $0x358] sm:$0xff]
  %v126 = vld [vmem:[%s0 + $0x360] sm:$0xff]
  %v127 = vld [vmem:[%s0 + $0x368] sm:$0xff]
  %v128 = vld [vmem:[%s0 + $0x370] sm:$0xff]
  %v129 = vld [vmem:[%s0 + $0x378] sm:$0xff]
  %v130 = vld [vmem:[%s0 + $0x380] sm:$0xff]
  %v131 = vld [vmem:[%s0 + $0x388] sm:$0xff]
  %v132 = vld [vmem:[%s0 + $0x390] sm:$0xff]
  %v133 = vld [vmem:[%s0 + $0x398] sm:$0xff]
  %v134 = vld [vmem:[%s0 + $0x3a0] sm:$0xff]
  %v135 = vld [vmem:[%s0 + $0x3a8] sm:$0xff]
  %v136 = vld [vmem:[%s0 + $0x3b0] sm:$0xff]
  %v137 = vld [vmem:[%s0 + $0x3b8] sm:$0xff]
  %v138 = vld [vmem:[%s0 + $0x3c0] sm:$0xff]
  %v139 = vld [vmem:[%s0 + $0x3c8] sm:$0xff]
  %v140 = vld [vmem:[%s0 + $0x3d0] sm:$0xff]
  %v141 = vld [vmem:[%s0 + $0x3d8] sm:$0xff]
  %v142 = vld [vmem:[%s0 + $0x3e0] sm:$0xff]
  %v143 = vld [vmem:[%s0 + $0x3e8] sm:$0xff]
  %v144 = vld [vmem:[%s0 + $0x3f0] sm:$0xff]
  %v145 = vld [vmem:[%s0 + $0x3f8] sm:$0xff]
  %v146 = vld [vmem:[%s0 + $0x400] sm:$0xff]
  %v147 = vld [vmem:[%s0 + $0x408] sm:$0xff]
  %v148 = vld [vmem:[%s0 + $0x410] sm:$0xff]
  %v149 = vld [vmem:[%s0 + $0x418] sm:$0xff]
  %v150 = vld [vmem:[%s0 + $0x420] sm:$0xff]
  %v151 = vld [vmem:[%s0 + $0x428] sm:$0xff]
  %v152 = vld [vmem:[%s0 + $0x430] sm:$0xff]
  %v153 = vld [vmem:[%s0 + $0x438] sm:$0xff]
  %v154 = vld [vmem:[%s0 + $0x440] sm:$0xff]
  %v155 = vld [vmem:[%s0 + $0x448] sm:$0xff]
  %v156 = vld [vmem:[%s0 + $0x450] sm:$0xff]
  %v157 = vld [vmem:[%s0 + $0x458] sm:$0xff]
  %v158 = vld [vmem:[%s0 + $0x460] sm:$0xff]
  %v159 = vld [vmem:[%s0 + $0x468] sm:$0xff]
  %v160 = vld [vmem:[%s0 + $0x470] sm:$0xff]
  %v161 = vld [vmem:[%s0 + $0x478] sm:$0xff]
  %v162 = vld [vmem:[%s0 + $0x480] sm:$0xff]
  %v163 = vld [vmem:[%s0 + $0x488] sm:$0xff]
  %v164 = vld [vmem:[%s0 + $0x490] sm:$0xff]
  %v165 = vld [vmem:[%s0 + $0x498] sm:$0xff]
  %v166 = vld [vmem:[%s0 + $0x4a0] sm:$0xff]
  %v167 = vld [vmem:[%s0 + $0x4a8] sm:$0xff]
  %v168 = vld [vmem:[%s0 + $0x4b0] sm:$0xff]
  %v169 = vld [vmem:[%s0 + $0x4b8] sm:$0xff]
  %v170 = vld [vmem:[%s0 + $0x4c0] sm:$0xff]
  %v171 = vld [vmem:[%s0 + $0x4c8] sm:$0xff]
  %v172 = vld [vmem:[%s0 + $0x4d0] sm:$0xff]
  %v173 = vld [vmem:[%s0 + $0x4d8] sm:$0xff]
  %v174 = vld [vmem:[%s0 + $0x4e0] sm:$0xff]
  %v175 = vld [vmem:[%s0 + $0x4e8] sm:$0xff]
  %v176 = vld [vmem:[%s0 + $0x4f0] sm:$0xff]
  %v177 = vld [vmem:[%s0 + $0x4f8] sm:$0xff]
  %v178 = vld [vmem:[%s0 + $0x500] sm:$0xff]
  %v179 = vld [vmem:[%s0 + $0x508] sm:$0xff]
  %v180 = vld [vmem:[%s0 + $0x510] sm:$0xff]
  %v181 = vld [vmem:[%s0 + $0x518] sm:$0xff]
  %v182 = vld [vmem:[%s0 + $0x520] sm:$0xff]
  %v183 = vld [vmem:[%s0 + $0x528] sm:$0xff]
  %v184 = vld [vmem:[%s0 + $0x530] sm:$0xff]
  %v185 = vld [vmem:[%s0 + $0x538] sm:$0xff]
  %v186 = vld [vmem:[%s0 + $0x540] sm:$0xff]
  %v187 = vld [vmem:[%s0 + $0x548] sm:$0xff]
  %v188 = vld [vmem:[%s0 + $0x550] sm:$0xff]
  %v189 = vld [vmem:[%s0 + $0x558] sm:$0xff]
  %v190 = vld [vmem:[%s0 + $0x560] sm:$0xff]
  %v191 = vld [vmem:[%s0 + $0x568] sm:$0xff]
  %v192 = vld [vmem:[%s0 + $0x570] sm:$0xff]
  %v193 = vld [vmem:[%s0 + $0x578] sm:$0xff]
  %v194 = vld [vmem:[%s0 + $0x580] sm:$0xff]
  %v195 = vld [vmem:[%s0 + $0x588] sm:$0xff]
  %v196 = vld [vmem:[%s0 + $0x590] sm:$0xff]
  %v197 = vld [vmem:[%s0 + $0x598] sm:$0xff]
  %v198 = vld [vmem:[%s0 + $0x5a0] sm:$0xff]
  %v199 = vld [vmem:[%s0 + $0x5a8] sm:$0xff]
  %v200 = vld [vmem:[%s0 + $0x5b0] sm:$0xff]
  %v201 = vld [vmem:[%s0 + $0x5b8] sm:$0xff]
  %v202 = vld [vmem:[%s0 + $0x5c0] sm:$0xff]
  %v203 = vld [vmem:[%s0 + $0x5c8] sm:$0xff]
  %v204 = vld [vmem:[%s0 + $0x5d0] sm:$0xff]
  %v205 = vld [vmem:[%s0 + $0x5d8] sm:$0xff]
  %v206 = vld [vmem:[%s0 + $0x5e0] sm:$0xff]
  %v207 = vld [vmem:[%s0 + $0x5e8] sm:$0xff]
  %v208 = vld [vmem:[%s0 + $0x5f0] sm:$0xff]
  %v209 = vld [vmem:[%s0 + $0x5f8] sm:$0xff]
  %v210 = vld [vmem:[%s0 + $0x600] sm:$0xff]
  %v211 = vld [vmem:[%s0 + $0x608] sm:$0xff]
  %v212 = vld [vmem:[%s0 + $0x610] sm:$0xff]
  %v213 = vld [vmem:[%s0 + $0x618] sm:$0xff]
  %v214 = vld [vmem:[%s0 + $0x620] sm:$0xff]
  %v215 = vld [vmem:[%s0 + $0x628] sm:$0xff]
  %v216 = vld [vmem:[%s0 + $0x630] sm:$0xff]
  %v217 = vld [vmem:[%s0 + $0x638] sm:$0xff]
  %v218 = vld [vmem:[%s0 + $0x640] sm:$0xff]
  %v219 = vld [vmem:[%s0 + $0x648] sm:$0xff]
  %v220 = vld [vmem:[%s0 + $0x650] sm:$0xff]
  %v221 = vld [vmem:[%s0 + $0x658] sm:$0xff]
  %v222 = vld [vmem:[%s0 + $0x660] sm:$0xff]
  %v223 = vld [vmem:[%s0 + $0x668] sm:$0xff]
  %v224 = vld [vmem:[%s0 + $0x670] sm:$0xff]
  %v225 = vld [vmem:[%s0 + $0x678] sm:$0xff]
  %v226 = vld [vmem:[%s0 + $0x680] sm:$0xff]
  %v227 = vld [vmem:[%s0 + $0x688] sm:$0xff]
  %v228 = vld [vmem:[%s0 + $0x690] sm:$0xff]
  %v229 = vld [vmem:[%s0 + $0x698] sm:$0xff]
  %v230 = vld [vmem:[%s0 + $0x6a0] sm:$0xff]
  %v231 = vld [vmem:[%s0 + $0x6a8] sm:$0xff]
  %v232 = vld [vmem:[%s0 + $0x6b0] sm:$0xff]
  %v233 = vld [vmem:[%s0 + $0x6b8] sm:$0xff]
  %v234 = vld [vmem:[%s0 + $0x6c0] sm:$0xff]
  %v235 = vld [vmem:[%s0 + $0x6c8] sm:$0xff]
  %v236 = vld [vmem:[%s0 + $0x6d0] sm:$0xff]
  %v237 = vld [vmem:[%s0 + $0x6d8] sm:$0xff]
  %v238 = vld [vmem:[%s0 + $0x6e0] sm:$0xff]
  %v239 = vld [vmem:[%s0 + $0x6e8] sm:$0xff]
  %v240 = vld [vmem:[%s0 + $0x6f0] sm:$0xff]
  %v241 = vld [vmem:[%s0 + $0x6f8] sm:$0xff]
  %v242 = vld [vmem:[%s0 + $0x700] sm:$0xff]
  %v243 = vld [vmem:[%s0 + $0x708] sm:$0xff]
  %v244 = vld [vmem:[%s0 + $0x710] sm:$0xff]
  %v245 = vld [vmem:[%s0 + $0x718] sm:$0xff]
  %v246 = vld [vmem:[%s0 + $0x720] sm:$0xff]
  %v247 = vld [vmem:[%s0 + $0x728] sm:$0xff]
  %v248 = vld [vmem:[%s0 + $0x730] sm:$0xff]
  %v249 = vld [vmem:[%s0 + $0x738] sm:$0xff]
  %v250 = vld [vmem:[%s0 + $0x740] sm:$0xff]
  %v251 = vld [vmem:[%s0 + $0x748] sm:$0xff]
  %v252 = vld [vmem:[%s0 + $0x750] sm:$0xff]
  %v253 = vld [vmem:[%s0 + $0x758] sm:$0xff]
  %v254 = vld [vmem:[%s0 + $0x760] sm:$0xff]
  %v255 = vld [vmem:[%s0 + $0x768] sm:$0xff]
  %v256 = vld [vmem:[%s0 + $0x770] sm:$0xff]
  %v257 = vld [vmem:[%s0 + $0x778] sm:$0xff]
  %v258 = vld [vmem:[%s0 + $0x780] sm:$0xff]
  %v259 = vld [vmem:[%s0 + $0x788] sm:$0xff]
  %v260 = vld [vmem:[%s0 + $0x790] sm:$0xff]
  %v261 = vld [vmem:[%s0 + $0x798] sm:$0xff]
  %v262 = vld [vmem:[%s0 + $0x7a0] sm:$0xff]
  %v263 = vld [vmem:[%s0 + $0x7a8] sm:$0xff]
  %v264 = vld [vmem:[%s0 + $0x7b0] sm:$0xff]
  %v265 = vld [vmem:[%s0 + $0x7b8] sm:$0xff]
  %v266 = vld [vmem:[%s0 + $0x7c0] sm:$0xff]
  %v267 = vld [vmem:[%s0 + $0x7c8] sm:$0xff]
  %v268 = vld [vmem:[%s0 + $0x7d0] sm:$0xff]
  %v269 = vld [vmem:[%s0 + $0x7d8] sm:$0xff]
  %v270 = vld [vmem:[%s0 + $0x7e0] sm:$0xff]
  %v271 = vld [vmem:[%s0 + $0x7e8] sm:$0xff]
  %v272 = vld [vmem:[%s0 + $0x7f0] sm:$0xff]
  %v273 = vld [vmem:[%s0 + $0x7f8] sm:$0xff]
  %v274 = vld [vmem:[%s0 + $0x800] sm:$0xff]
  %v275 = vld [vmem:[%s0 + $0x808] sm:$0xff]
  %v276 = vld [vmem:[%s0 + $0x810] sm:$0xff]
  %v277 = vld [vmem:[%s0 + $0x818] sm:$0xff]
  %v278 = vld [vmem:[%s0 + $0x820] sm:$0xff]
  %v279 = vld [vmem:[%s0 + $0x828] sm:$0xff]
  %v280 = vld [vmem:[%s0 + $0x830] sm:$0xff]
  %v281 = vld [vmem:[%s0 + $0x838] sm:$0xff]
  %v282 = vld [vmem:[%s0 + $0x840] sm:$0xff]
  %v283 = vld [vmem:[%s0 + $0x848] sm:$0xff]
  %v284 = vld [vmem:[%s0 + $0x850] sm:$0xff]
  %v285 = vld [vmem:[%s0 + $0x858] sm:$0xff]
  %v286 = vld [vmem:[%s0 + $0x860] sm:$0xff]
  %v287 = vld [vmem:[%s0 + $0x868] sm:$0xff]
  %v288 = vld [vmem:[%s0 + $0x870] sm:$0xff]
  %v289 = vld [vmem:[%s0 + $0x878] sm:$0xff]
  %v290 = vld [vmem:[%s0 + $0x880] sm:$0xff]
  %v291 = vld [vmem:[%s0 + $0x888] sm:$0xff]
  %v292 = vld [vmem:[%s0 + $0x890] sm:$0xff]
  %v293 = vld [vmem:[%s0 + $0x898] sm:$0xff]
  %v294 = vld [vmem:[%s0 + $0x8a0] sm:$0xff]
  %v295 = vld [vmem:[%s0 + $0x8a8] sm:$0xff]
  %v296 = vld [vmem:[%s0 + $0x8b0] sm:$0xff]
  %v297 = vld [vmem:[%s0 + $0x8b8] sm:$0xff]
  %v298 = vld [vmem:[%s0 + $0x8c0] sm:$0xff]
  %v299 = vld [vmem:[%s0 + $0x8c8] sm:$0xff]
  %v300 = vld [vmem:[%s0 + $0x8d0] sm:$0xff]
  %v301 = vld [vmem:[%s0 + $0x8d8] sm:$0xff]
  %v302 = vld [vmem:[%s0 + $0x8e0] sm:$0xff]
  %v303 = vld [vmem:[%s0 + $0x8e8] sm:$0xff]
  %v304 = vld [vmem:[%s0 + $0x8f0] sm:$0xff]
  %v305 = vld [vmem:[%s0 + $0x8f8] sm:$0xff]
  %v306 = vld [vmem:[%s0 + $0x900] sm:$0xff]
  %v307 = vld [vmem:[%s0 + $0x908] sm:$0xff]
  %v308 = vld [vmem:[%s0 + $0x910] sm:$0xff]
  %v309 = vld [vmem:[%s0 + $0x918] sm:$0xff]
  %v310 = vld [vmem:[%s0 + $0x920] sm:$0xff]
  %v311 = vld [vmem:[%s0 + $0x928] sm:$0xff]
  %v312 = vld [vmem:[%s0 + $0x930] sm:$0xff]
  %v313 = vld [vmem:[%s0 + $0x938] sm:$0xff]
  %v314 = vld [vmem:[%s0 + $0x940] sm:$0xff]
  %v315 = vld [vmem:[%s0 + $0x948] sm:$0xff]
  %v316 = vld [vmem:[%s0 + $0x950] sm:$0xff]
  %v317 = vld [vmem:[%s0 + $0x958] sm:$0xff]
  %v318 = vpack.c.bf16 %v20, %v18
  %v319 = vpack.c.bf16 %v21, %v19
  %v320 = vpack.c.bf16 %v24, %v22
  %v321 = vpack.c.bf16 %v25, %v23
  %v322 = vpack.c.bf16 %v28, %v26
  %v323 = vpack.c.bf16 %v29, %v27
  %v324 = vpack.c.bf16 %v32, %v30
  %v325 = vpack.c.bf16 %v33, %v31
  %v326 = vpack.c.bf16 %v36, %v34
  %v327 = vpack.c.bf16 %v37, %v35
  %v328 = vpack.c.bf16 %v40, %v38
  %v329 = vpack.c.bf16 %v41, %v39
  %v330 = vpack.c.bf16 %v44, %v42
  %v331 = vpack.c.bf16 %v45, %v43
  %v332 = vpack.c.bf16 %v48, %v46
  %v333 = vpack.c.bf16 %v49, %v47
  %v334 = vpack.c.bf16 %v52, %v50
  %v335 = vpack.c.bf16 %v53, %v51
  %v336 = vpack.c.bf16 %v56, %v54
  %v337 = vpack.c.bf16 %v57, %v55
  %v338 = vpack.c.bf16 %v60, %v58
  %v339 = vpack.c.bf16 %v61, %v59
  %v340 = vpack.c.bf16 %v64, %v62
  %v341 = vpack.c.bf16 %v65, %v63
  %v342 = vpack.c.bf16 %v68, %v66
  %v343 = vpack.c.bf16 %v69, %v67
  %v344 = vpack.c.bf16 %v72, %v70
  %v345 = vpack.c.bf16 %v73, %v71
  %v346 = vpack.c.bf16 %v76, %v74
  %v347 = vpack.c.bf16 %v77, %v75
  %v348 = vpack.c.bf16 %v80, %v78
  %v349 = vpack.c.bf16 %v81, %v79
  %v350 = vpack.c.bf16 %v84, %v82
  %v351 = vpack.c.bf16 %v85, %v83
  %v352 = vpack.c.bf16 %v88, %v86
  %v353 = vpack.c.bf16 %v89, %v87
  %v354 = vpack.c.bf16 %v92, %v90
  %v355 = vpack.c.bf16 %v93, %v91
  %v356 = vpack.c.bf16 %v96, %v94
  %v357 = vpack.c.bf16 %v97, %v95
  %v358 = vpack.c.bf16 %v100, %v98
  %v359 = vpack.c.bf16 %v101, %v99
  %v360 = vpack.c.bf16 %v104, %v102
  %v361 = vpack.c.bf16 %v105, %v103
  %v362 = vpack.c.bf16 %v108, %v106
  %v363 = vpack.c.bf16 %v109, %v107
  %v364 = vpack.c.bf16 %v112, %v110
  %v365 = vpack.c.bf16 %v113, %v111
  %v366 = vpack.c.bf16 %v116, %v114
  %v367 = vpack.c.bf16 %v117, %v115
  %v368 = vpack.c.bf16 %v120, %v118
  %v369 = vpack.c.bf16 %v121, %v119
  %v370 = vpack.c.bf16 %v124, %v122
  %v371 = vpack.c.bf16 %v125, %v123
  %v372 = vpack.c.bf16 %v128, %v126
  %v373 = vpack.c.bf16 %v129, %v127
  %v374 = vpack.c.bf16 %v132, %v130
  %v375 = vpack.c.bf16 %v133, %v131
  %v376 = vpack.c.bf16 %v136, %v134
  %v377 = vpack.c.bf16 %v137, %v135
  %v378 = vpack.c.bf16 %v140, %v138
  %v379 = vpack.c.bf16 %v141, %v139
  %v380 = vpack.c.bf16 %v144, %v142
  %v381 = vpack.c.bf16 %v145, %v143
  %v382 = vpack.c.bf16 %v148, %v146
  %v383 = vpack.c.bf16 %v149, %v147
  %v384 = vpack.c.bf16 %v152, %v150
  %v385 = vpack.c.bf16 %v153, %v151
  %v386 = vpack.c.bf16 %v156, %v154
  %v387 = vpack.c.bf16 %v157, %v155
  %v388 = vpack.c.bf16 %v160, %v158
  %v389 = vpack.c.bf16 %v161, %v159
  %v390 = vpack.c.bf16 %v164, %v162
  %v391 = vpack.c.bf16 %v165, %v163
  %v392 = vpack.c.bf16 %v168, %v166
  %v393 = vpack.c.bf16 %v169, %v167
  %v394 = vpack.c.bf16 %v172, %v170
  %v395 = vpack.c.bf16 %v173, %v171
  %v396 = vpack.c.bf16 %v176, %v174
  %v397 = vpack.c.bf16 %v177, %v175
  %v398 = vpack.c.bf16 %v180, %v178
  %v399 = vpack.c.bf16 %v181, %v179
  %v400 = vpack.c.bf16 %v184, %v182
  %v401 = vpack.c.bf16 %v185, %v183
  %v402 = vpack.c.bf16 %v188, %v186
  %v403 = vpack.c.bf16 %v189, %v187
  %v404 = vpack.c.bf16 %v192, %v190
  %v405 = vpack.c.bf16 %v193, %v191
  %v406 = vpack.c.bf16 %v196, %v194
  %v407 = vpack.c.bf16 %v197, %v195
  %v408 = vpack.c.bf16 %v200, %v198
  %v409 = vpack.c.bf16 %v201, %v199
  %v410 = vpack.c.bf16 %v204, %v202
  %v411 = vpack.c.bf16 %v205, %v203
  %v412 = vpack.c.bf16 %v208, %v206
  %v413 = vpack.c.bf16 %v209, %v207
  %v414 = vpack.c.bf16 %v212, %v210
  %v415 = vpack.c.bf16 %v213, %v211
  %v416 = vpack.c.bf16 %v216, %v214
  %v417 = vpack.c.bf16 %v217, %v215
  %v418 = vpack.c.bf16 %v220, %v218
  %v419 = vpack.c.bf16 %v221, %v219
  %v420 = vpack.c.bf16 %v224, %v222
  %v421 = vpack.c.bf16 %v225, %v223
  %v422 = vpack.c.bf16 %v228, %v226
  %v423 = vpack.c.bf16 %v229, %v227
  %v424 = vpack.c.bf16 %v232, %v230
  %v425 = vpack.c.bf16 %v233, %v231
  %v426 = vpack.c.bf16 %v236, %v234
  %v427 = vpack.c.bf16 %v237, %v235
  %v428 = vpack.c.bf16 %v240, %v238
  %v429 = vpack.c.bf16 %v241, %v239
  %v430 = vpack.c.bf16 %v244, %v242
  %v431 = vpack.c.bf16 %v245, %v243
  %v432 = vpack.c.bf16 %v248, %v246
  %v433 = vpack.c.bf16 %v249, %v247
  %v434 = vpack.c.bf16 %v252, %v250
  %v435 = vpack.c.bf16 %v253, %v251
  %v436 = vpack.c.bf16 %v256, %v254
  %v437 = vpack.c.bf16 %v257, %v255
  %v438 = vpack.c.bf16 %v260, %v258
  %v439 = vpack.c.bf16 %v261, %v259
  %v440 = vpack.c.bf16 %v264, %v262
  %v441 = vpack.c.bf16 %v265, %v263
  %v442 = vpack.c.bf16 %v268, %v266
  %v443 = vpack.c.bf16 %v269, %v267
  %v444 = vpack.c.bf16 %v272, %v270
  %v445 = vpack.c.bf16 %v273, %v271
  %v446 = vpack.c.bf16 %v276, %v274
  %v447 = vpack.c.bf16 %v277, %v275
  %v448 = vpack.c.bf16 %v280, %v278
  %v449 = vpack.c.bf16 %v281, %v279
  %v450 = vpack.c.bf16 %v284, %v282
  %v451 = vpack.c.bf16 %v285, %v283
  %v452 = vpack.c.bf16 %v288, %v286
  %v453 = vpack.c.bf16 %v289, %v287
  %v454 = vpack.c.bf16 %v292, %v290
  %v455 = vpack.c.bf16 %v293, %v291
  %v456 = vpack.c.bf16 %v296, %v294
  %v457 = vpack.c.bf16 %v297, %v295
  %v458 = vpack.c.bf16 %v300, %v298
  %v459 = vpack.c.bf16 %v301, %v299
  %v460 = vpack.c.bf16 %v304, %v302
  %v461 = vpack.c.bf16 %v305, %v303
  %v462 = vpack.c.bf16 %v308, %v306
  %v463 = vpack.c.bf16 %v309, %v307
  %v464 = vpack.c.bf16 %v312, %v310
  %v465 = vpack.c.bf16 %v313, %v311
  %v466 = vpack.c.bf16 %v316, %v314
  %v467 = vpack.c.bf16 %v317, %v315
  %v468 = vld [vmem:[%s1] sm:$0xff]
  %v469 = vld [vmem:[%s1 + $0x8] sm:$0xff]
  %v470 = vld [vmem:[%s1 + $0x10] sm:$0xff]
  %v471 = vld [vmem:[%s1 + $0x18] sm:$0xff]
  %v472 = vld [vmem:[%s1 + $0x20] sm:$0xff]
  %v473 = vld [vmem:[%s1 + $0x28] sm:$0xff]
  %v474 = vld [vmem:[%s1 + $0x30] sm:$0xff]
  %v475 = vld [vmem:[%s1 + $0x38] sm:$0xff]
  %v476 = vld [vmem:[%s1 + $0x40] sm:$0xff]
  %v477 = vld [vmem:[%s1 + $0x48] sm:$0xff]
  %v478 = vld [vmem:[%s1 + $0x50] sm:$0xff]
  %v479 = vld [vmem:[%s1 + $0x58] sm:$0xff]
  %v480 = vld [vmem:[%s1 + $0x60] sm:$0xff]
  %v481 = vld [vmem:[%s1 + $0x68] sm:$0xff]
  %v482 = vld [vmem:[%s1 + $0x70] sm:$0xff]
  %v483 = vld [vmem:[%s1 + $0x78] sm:$0xff]
  %v484 = vld [vmem:[%s1 + $0x80] sm:$0xff]
  %v485 = vld [vmem:[%s1 + $0x88] sm:$0xff]
  %v486 = vld [vmem:[%s1 + $0x90] sm:$0xff]
  %v487 = vld [vmem:[%s1 + $0x98] sm:$0xff]
  %v488 = vld [vmem:[%s1 + $0xa0] sm:$0xff]
  %v489 = vld [vmem:[%s1 + $0xa8] sm:$0xff]
  %v490 = vld [vmem:[%s1 + $0xb0] sm:$0xff]
  %v491 = vld [vmem:[%s1 + $0xb8] sm:$0xff]
  %v492 = vld [vmem:[%s1 + $0xc0] sm:$0xff]
  %v493 = vld [vmem:[%s1 + $0xc8] sm:$0xff]
  %v494 = vld [vmem:[%s1 + $0xd0] sm:$0xff]
  %v495 = vld [vmem:[%s1 + $0xd8] sm:$0xff]
  %v496 = vld [vmem:[%s1 + $0xe0] sm:$0xff]
  %v497 = vld [vmem:[%s1 + $0xe8] sm:$0xff]
  %v498 = vld [vmem:[%s1 + $0xf0] sm:$0xff]
  %v499 = vld [vmem:[%s1 + $0xf8] sm:$0xff]
  %v500 = vld [vmem:[%s1 + $0x100] sm:$0xff]
  %v501 = vld [vmem:[%s1 + $0x108] sm:$0xff]
  %v502 = vld [vmem:[%s1 + $0x110] sm:$0xff]
  %v503 = vld [vmem:[%s1 + $0x118] sm:$0xff]
  %v504 = vld [vmem:[%s1 + $0x120] sm:$0xff]
  %v505 = vld [vmem:[%s1 + $0x128] sm:$0xff]
  %v506 = vld [vmem:[%s1 + $0x130] sm:$0xff]
  %v507 = vld [vmem:[%s1 + $0x138] sm:$0xff]
  %v508 = vld [vmem:[%s1 + $0x140] sm:$0xff]
  %v509 = vld [vmem:[%s1 + $0x148] sm:$0xff]
  %v510 = vld [vmem:[%s1 + $0x150] sm:$0xff]
  %v511 = vld [vmem:[%s1 + $0x158] sm:$0xff]
  %v512 = vld [vmem:[%s1 + $0x160] sm:$0xff]
  %v513 = vld [vmem:[%s1 + $0x168] sm:$0xff]
  %v514 = vld [vmem:[%s1 + $0x170] sm:$0xff]
  %v515 = vld [vmem:[%s1 + $0x178] sm:$0xff]
  %v516 = vld [vmem:[%s1 + $0x180] sm:$0xff]
  %v517 = vld [vmem:[%s1 + $0x188] sm:$0xff]
  %v518 = vld [vmem:[%s1 + $0x190] sm:$0xff]
  %v519 = vld [vmem:[%s1 + $0x198] sm:$0xff]
  %v520 = vld [vmem:[%s1 + $0x1a0] sm:$0xff]
  %v521 = vld [vmem:[%s1 + $0x1a8] sm:$0xff]
  %v522 = vld [vmem:[%s1 + $0x1b0] sm:$0xff]
  %v523 = vld [vmem:[%s1 + $0x1b8] sm:$0xff]
  %v524 = vld [vmem:[%s1 + $0x1c0] sm:$0xff]
  %v525 = vld [vmem:[%s1 + $0x1c8] sm:$0xff]
  %v526 = vld [vmem:[%s1 + $0x1d0] sm:$0xff]
  %v527 = vld [vmem:[%s1 + $0x1d8] sm:$0xff]
  %v528 = vld [vmem:[%s1 + $0x1e0] sm:$0xff]
  %v529 = vld [vmem:[%s1 + $0x1e8] sm:$0xff]
  %v530 = vld [vmem:[%s1 + $0x1f0] sm:$0xff]
  %v531 = vld [vmem:[%s1 + $0x1f8] sm:$0xff]
  %v532 = vld [vmem:[%s1 + $0x200] sm:$0xff]
  %v533 = vld [vmem:[%s1 + $0x208] sm:$0xff]
  %v534 = vld [vmem:[%s1 + $0x210] sm:$0xff]
  %v535 = vld [vmem:[%s1 + $0x218] sm:$0xff]
  %v536 = vld [vmem:[%s1 + $0x220] sm:$0xff]
  %v537 = vld [vmem:[%s1 + $0x228] sm:$0xff]
  %v538 = vld [vmem:[%s1 + $0x230] sm:$0xff]
  %v539 = vld [vmem:[%s1 + $0x238] sm:$0xff]
  %v540 = vld [vmem:[%s1 + $0x240] sm:$0xff]
  %v541 = vld [vmem:[%s1 + $0x248] sm:$0xff]
  %v542 = vld [vmem:[%s1 + $0x250] sm:$0xff]
  %v543 = vld [vmem:[%s1 + $0x258] sm:$0xff]
  %v544 = vld [vmem:[%s1 + $0x260] sm:$0xff]
  %v545 = vld [vmem:[%s1 + $0x268] sm:$0xff]
  %v546 = vld [vmem:[%s1 + $0x270] sm:$0xff]
  %v547 = vld [vmem:[%s1 + $0x278] sm:$0xff]
  %v548 = vld [vmem:[%s1 + $0x280] sm:$0xff]
  %v549 = vld [vmem:[%s1 + $0x288] sm:$0xff]
  %v550 = vld [vmem:[%s1 + $0x290] sm:$0xff]
  %v551 = vld [vmem:[%s1 + $0x298] sm:$0xff]
  %v552 = vld [vmem:[%s1 + $0x2a0] sm:$0xff]
  %v553 = vld [vmem:[%s1 + $0x2a8] sm:$0xff]
  %v554 = vld [vmem:[%s1 + $0x2b0] sm:$0xff]
  %v555 = vld [vmem:[%s1 + $0x2b8] sm:$0xff]
  %v556 = vld [vmem:[%s1 + $0x2c0] sm:$0xff]
  %v557 = vld [vmem:[%s1 + $0x2c8] sm:$0xff]
  %v558 = vld [vmem:[%s1 + $0x2d0] sm:$0xff]
  %v559 = vld [vmem:[%s1 + $0x2d8] sm:$0xff]
  %v560 = vld [vmem:[%s1 + $0x2e0] sm:$0xff]
  %v561 = vld [vmem:[%s1 + $0x2e8] sm:$0xff]
  %v562 = vld [vmem:[%s1 + $0x2f0] sm:$0xff]
  %v563 = vld [vmem:[%s1 + $0x2f8] sm:$0xff]
  %v564 = vld [vmem:[%s1 + $0x300] sm:$0xff]
  %v565 = vld [vmem:[%s1 + $0x308] sm:$0xff]
  %v566 = vld [vmem:[%s1 + $0x310] sm:$0xff]
  %v567 = vld [vmem:[%s1 + $0x318] sm:$0xff]
  %v568 = vld [vmem:[%s1 + $0x320] sm:$0xff]
  %v569 = vld [vmem:[%s1 + $0x328] sm:$0xff]
  %v570 = vld [vmem:[%s1 + $0x330] sm:$0xff]
  %v571 = vld [vmem:[%s1 + $0x338] sm:$0xff]
  %v572 = vld [vmem:[%s1 + $0x340] sm:$0xff]
  %v573 = vld [vmem:[%s1 + $0x348] sm:$0xff]
  %v574 = vld [vmem:[%s1 + $0x350] sm:$0xff]
  %v575 = vld [vmem:[%s1 + $0x358] sm:$0xff]
  %v576 = vld [vmem:[%s1 + $0x360] sm:$0xff]
  %v577 = vld [vmem:[%s1 + $0x368] sm:$0xff]
  %v578 = vld [vmem:[%s1 + $0x370] sm:$0xff]
  %v579 = vld [vmem:[%s1 + $0x378] sm:$0xff]
  %v580 = vld [vmem:[%s1 + $0x380] sm:$0xff]
  %v581 = vld [vmem:[%s1 + $0x388] sm:$0xff]
  %v582 = vld [vmem:[%s1 + $0x390] sm:$0xff]
  %v583 = vld [vmem:[%s1 + $0x398] sm:$0xff]
  %v584 = vld [vmem:[%s1 + $0x3a0] sm:$0xff]
  %v585 = vld [vmem:[%s1 + $0x3a8] sm:$0xff]
  %v586 = vld [vmem:[%s1 + $0x3b0] sm:$0xff]
  %v587 = vld [vmem:[%s1 + $0x3b8] sm:$0xff]
  %v588 = vld [vmem:[%s1 + $0x3c0] sm:$0xff]
  %v589 = vld [vmem:[%s1 + $0x3c8] sm:$0xff]
  %v590 = vld [vmem:[%s1 + $0x3d0] sm:$0xff]
  %v591 = vld [vmem:[%s1 + $0x3d8] sm:$0xff]
  %v592 = vld [vmem:[%s1 + $0x3e0] sm:$0xff]
  %v718 = vunpack.c.l.b16 %v468
  %v719 = vunpack.c.h.b16 %v468
  %v720 = vunpack.c.l.b16 %v469
  %v721 = vunpack.c.h.b16 %v469
  %v722 = vunpack.c.l.b16 %v470
  %v723 = vunpack.c.h.b16 %v470
  %v724 = vunpack.c.l.b16 %v471
  %v725 = vunpack.c.h.b16 %v471
  %v726 = vunpack.c.l.b16 %v472
  %v727 = vunpack.c.h.b16 %v472
  %v728 = vunpack.c.l.b16 %v473
  %v729 = vunpack.c.h.b16 %v473
  %v730 = vunpack.c.l.b16 %v474
  %v731 = vunpack.c.h.b16 %v474
  %v732 = vunpack.c.l.b16 %v475
  %v733 = vunpack.c.h.b16 %v475
  %v734 = vunpack.c.l.b16 %v476
  %v735 = vunpack.c.h.b16 %v476
  %v736 = vunpack.c.l.b16 %v477
  %v737 = vunpack.c.h.b16 %v477
  %v738 = vunpack.c.l.b16 %v478
  %v739 = vunpack.c.h.b16 %v478
  %v740 = vunpack.c.l.b16 %v479
  %v741 = vunpack.c.h.b16 %v479
  %v742 = vunpack.c.l.b16 %v480
  %v743 = vunpack.c.h.b16 %v480
  %v744 = vunpack.c.l.b16 %v481
  %v745 = vunpack.c.h.b16 %v481
  %v746 = vunpack.c.l.b16 %v482
  %v747 = vunpack.c.h.b16 %v482
  %v748 = vunpack.c.l.b16 %v483
  %v749 = vunpack.c.h.b16 %v483
  %v750 = vunpack.c.l.b16 %v484
  %v751 = vunpack.c.h.b16 %v484
  %v752 = vunpack.c.l.b16 %v485
  %v753 = vunpack.c.h.b16 %v485
  %v754 = vunpack.c.l.b16 %v486
  %v755 = vunpack.c.h.b16 %v486
  %v756 = vunpack.c.l.b16 %v487
  %v757 = vunpack.c.h.b16 %v487
  %v758 = vunpack.c.l.b16 %v488
  %v759 = vunpack.c.h.b16 %v488
  %v760 = vunpack.c.l.b16 %v489
  %v761 = vunpack.c.h.b16 %v489
  %v762 = vunpack.c.l.b16 %v490
  %v763 = vunpack.c.h.b16 %v490
  %v764 = vunpack.c.l.b16 %v491
  %v765 = vunpack.c.h.b16 %v491
  %v766 = vunpack.c.l.b16 %v492
  %v767 = vunpack.c.h.b16 %v492
  %v768 = vunpack.c.l.b16 %v493
  %v769 = vunpack.c.h.b16 %v493
  %v770 = vunpack.c.l.b16 %v494
  %v771 = vunpack.c.h.b16 %v494
  %v772 = vunpack.c.l.b16 %v495
  %v773 = vunpack.c.h.b16 %v495
  %v774 = vunpack.c.l.b16 %v496
  %v775 = vunpack.c.h.b16 %v496
  %v776 = vunpack.c.l.b16 %v497
  %v777 = vunpack.c.h.b16 %v497
  %v778 = vunpack.c.l.b16 %v498
  %v779 = vunpack.c.h.b16 %v498
  %v780 = vunpack.c.l.b16 %v499
  %v781 = vunpack.c.h.b16 %v499
  %v782 = vunpack.c.l.b16 %v500
  %v783 = vunpack.c.h.b16 %v500
  %v784 = vunpack.c.l.b16 %v501
  %v785 = vunpack.c.h.b16 %v501
  %v786 = vunpack.c.l.b16 %v502
  %v787 = vunpack.c.h.b16 %v502
  %v788 = vunpack.c.l.b16 %v503
  %v789 = vunpack.c.h.b16 %v503
  %v790 = vunpack.c.l.b16 %v504
  %v791 = vunpack.c.h.b16 %v504
  %v792 = vunpack.c.l.b16 %v505
  %v793 = vunpack.c.h.b16 %v505
  %v794 = vunpack.c.l.b16 %v506
  %v795 = vunpack.c.h.b16 %v506
  %v796 = vunpack.c.l.b16 %v507
  %v797 = vunpack.c.h.b16 %v507
  %v798 = vunpack.c.l.b16 %v508
  %v799 = vunpack.c.h.b16 %v508
  %v800 = vunpack.c.l.b16 %v509
  %v801 = vunpack.c.h.b16 %v509
  %v802 = vunpack.c.l.b16 %v510
  %v803 = vunpack.c.h.b16 %v510
  %v804 = vunpack.c.l.b16 %v511
  %v805 = vunpack.c.h.b16 %v511
  %v806 = vunpack.c.l.b16 %v512
  %v807 = vunpack.c.h.b16 %v512
  %v808 = vunpack.c.l.b16 %v513
  %v809 = vunpack.c.h.b16 %v513
  %v810 = vunpack.c.l.b16 %v514
  %v811 = vunpack.c.h.b16 %v514
  %v812 = vunpack.c.l.b16 %v515
  %v813 = vunpack.c.h.b16 %v515
  %v814 = vunpack.c.l.b16 %v516
  %v815 = vunpack.c.h.b16 %v516
  %v816 = vunpack.c.l.b16 %v517
  %v817 = vunpack.c.h.b16 %v517
  %v818 = vunpack.c.l.b16 %v518
  %v819 = vunpack.c.h.b16 %v518
  %v820 = vunpack.c.l.b16 %v519
  %v821 = vunpack.c.h.b16 %v519
  %v822 = vunpack.c.l.b16 %v520
  %v823 = vunpack.c.h.b16 %v520
  %v824 = vunpack.c.l.b16 %v521
  %v825 = vunpack.c.h.b16 %v521
  %v826 = vunpack.c.l.b16 %v522
  %v827 = vunpack.c.h.b16 %v522
  %v828 = vunpack.c.l.b16 %v523
  %v829 = vunpack.c.h.b16 %v523
  %v830 = vunpack.c.l.b16 %v524
  %v831 = vunpack.c.h.b16 %v524
  %v832 = vunpack.c.l.b16 %v525
  %v833 = vunpack.c.h.b16 %v525
  %v834 = vunpack.c.l.b16 %v526
  %v835 = vunpack.c.h.b16 %v526
  %v836 = vunpack.c.l.b16 %v527
  %v837 = vunpack.c.h.b16 %v527
  %v838 = vunpack.c.l.b16 %v528
  %v839 = vunpack.c.h.b16 %v528
  %v840 = vunpack.c.l.b16 %v529
  %v841 = vunpack.c.h.b16 %v529
  %v842 = vunpack.c.l.b16 %v530
  %v843 = vunpack.c.h.b16 %v530
  %v844 = vunpack.c.l.b16 %v531
  %v845 = vunpack.c.h.b16 %v531
  %v846 = vunpack.c.l.b16 %v532
  %v847 = vunpack.c.h.b16 %v532
  %v848 = vunpack.c.l.b16 %v533
  %v849 = vunpack.c.h.b16 %v533
  %v850 = vunpack.c.l.b16 %v534
  %v851 = vunpack.c.h.b16 %v534
  %v852 = vunpack.c.l.b16 %v535
  %v853 = vunpack.c.h.b16 %v535
  %v854 = vunpack.c.l.b16 %v536
  %v855 = vunpack.c.h.b16 %v536
  %v856 = vunpack.c.l.b16 %v537
  %v857 = vunpack.c.h.b16 %v537
  %v858 = vunpack.c.l.b16 %v538
  %v859 = vunpack.c.h.b16 %v538
  %v860 = vunpack.c.l.b16 %v539
  %v861 = vunpack.c.h.b16 %v539
  %v862 = vunpack.c.l.b16 %v540
  %v863 = vunpack.c.h.b16 %v540
  %v864 = vunpack.c.l.b16 %v541
  %v865 = vunpack.c.h.b16 %v541
  %v866 = vunpack.c.l.b16 %v542
  %v867 = vunpack.c.h.b16 %v542
  %v868 = vunpack.c.l.b16 %v543
  %v869 = vunpack.c.h.b16 %v543
  %v870 = vunpack.c.l.b16 %v544
  %v871 = vunpack.c.h.b16 %v544
  %v872 = vunpack.c.l.b16 %v545
  %v873 = vunpack.c.h.b16 %v545
  %v874 = vunpack.c.l.b16 %v546
  %v875 = vunpack.c.h.b16 %v546
  %v876 = vunpack.c.l.b16 %v547
  %v877 = vunpack.c.h.b16 %v547
  %v878 = vunpack.c.l.b16 %v548
  %v879 = vunpack.c.h.b16 %v548
  %v880 = vunpack.c.l.b16 %v549
  %v881 = vunpack.c.h.b16 %v549
  %v882 = vunpack.c.l.b16 %v550
  %v883 = vunpack.c.h.b16 %v550
  %v884 = vunpack.c.l.b16 %v551
  %v885 = vunpack.c.h.b16 %v551
  %v886 = vunpack.c.l.b16 %v552
  %v887 = vunpack.c.h.b16 %v552
  %v888 = vunpack.c.l.b16 %v553
  %v889 = vunpack.c.h.b16 %v553
  %v890 = vunpack.c.l.b16 %v554
  %v891 = vunpack.c.h.b16 %v554
  %v892 = vunpack.c.l.b16 %v555
  %v893 = vunpack.c.h.b16 %v555
  %v894 = vunpack.c.l.b16 %v556
  %v895 = vunpack.c.h.b16 %v556
  %v896 = vunpack.c.l.b16 %v557
  %v897 = vunpack.c.h.b16 %v557
  %v898 = vunpack.c.l.b16 %v558
  %v899 = vunpack.c.h.b16 %v558
  %v900 = vunpack.c.l.b16 %v559
  %v901 = vunpack.c.h.b16 %v559
  %v902 = vunpack.c.l.b16 %v560
  %v903 = vunpack.c.h.b16 %v560
  %v904 = vunpack.c.l.b16 %v561
  %v905 = vunpack.c.h.b16 %v561
  %v906 = vunpack.c.l.b16 %v562
  %v907 = vunpack.c.h.b16 %v562
  %v908 = vunpack.c.l.b16 %v563
  %v909 = vunpack.c.h.b16 %v563
  %v910 = vunpack.c.l.b16 %v564
  %v911 = vunpack.c.h.b16 %v564
  %v912 = vunpack.c.l.b16 %v565
  %v913 = vunpack.c.h.b16 %v565
  %v914 = vunpack.c.l.b16 %v566
  %v915 = vunpack.c.h.b16 %v566
  %v916 = vunpack.c.l.b16 %v567
  %v917 = vunpack.c.h.b16 %v567
  %v918 = vunpack.c.l.b16 %v568
  %v919 = vunpack.c.h.b16 %v568
  %v920 = vunpack.c.l.b16 %v569
  %v921 = vunpack.c.h.b16 %v569
  %v922 = vunpack.c.l.b16 %v570
  %v923 = vunpack.c.h.b16 %v570
  %v924 = vunpack.c.l.b16 %v571
  %v925 = vunpack.c.h.b16 %v571
  %v926 = vunpack.c.l.b16 %v572
  %v927 = vunpack.c.h.b16 %v572
  %v928 = vunpack.c.l.b16 %v573
  %v929 = vunpack.c.h.b16 %v573
  %v930 = vunpack.c.l.b16 %v574
  %v931 = vunpack.c.h.b16 %v574
  %v932 = vunpack.c.l.b16 %v575
  %v933 = vunpack.c.h.b16 %v575
  %v934 = vunpack.c.l.b16 %v576
  %v935 = vunpack.c.h.b16 %v576
  %v936 = vunpack.c.l.b16 %v577
  %v937 = vunpack.c.h.b16 %v577
  %v938 = vunpack.c.l.b16 %v578
  %v939 = vunpack.c.h.b16 %v578
  %v940 = vunpack.c.l.b16 %v579
  %v941 = vunpack.c.h.b16 %v579
  %v942 = vunpack.c.l.b16 %v580
  %v943 = vunpack.c.h.b16 %v580
  %v944 = vunpack.c.l.b16 %v581
  %v945 = vunpack.c.h.b16 %v581
  %v946 = vunpack.c.l.b16 %v582
  %v947 = vunpack.c.h.b16 %v582
  %v948 = vunpack.c.l.b16 %v583
  %v949 = vunpack.c.h.b16 %v583
  %v950 = vunpack.c.l.b16 %v584
  %v951 = vunpack.c.h.b16 %v584
  %v952 = vunpack.c.l.b16 %v585
  %v953 = vunpack.c.h.b16 %v585
  %v954 = vunpack.c.l.b16 %v586
  %v955 = vunpack.c.h.b16 %v586
  %v956 = vunpack.c.l.b16 %v587
  %v957 = vunpack.c.h.b16 %v587
  %v958 = vunpack.c.l.b16 %v588
  %v959 = vunpack.c.h.b16 %v588
  %v960 = vunpack.c.l.b16 %v589
  %v961 = vunpack.c.h.b16 %v589
  %v962 = vunpack.c.l.b16 %v590
  %v963 = vunpack.c.h.b16 %v590
  %v964 = vunpack.c.l.b16 %v591
  %v965 = vunpack.c.h.b16 %v591
  %v966 = vunpack.c.l.b16 %v592
  %v967 = vunpack.c.h.b16 %v592
  %v968 = vpack.c.b16 %v728, %v718
  %v969 = vpack.c.b16 %v729, %v719
  %v970 = vpack.c.b16 %v730, %v720
  %v971 = vpack.c.b16 %v731, %v721
  %v972 = vpack.c.b16 %v732, %v722
  %v973 = vpack.c.b16 %v733, %v723
  %v974 = vpack.c.b16 %v734, %v724
  %v975 = vpack.c.b16 %v735, %v725
  %v976 = vpack.c.b16 %v736, %v726
  %v977 = vpack.c.b16 %v737, %v727
  %v978 = vpack.c.b16 %v748, %v738
  %v979 = vpack.c.b16 %v749, %v739
  %v980 = vpack.c.b16 %v750, %v740
  %v981 = vpack.c.b16 %v751, %v741
  %v982 = vpack.c.b16 %v752, %v742
  %v983 = vpack.c.b16 %v753, %v743
  %v984 = vpack.c.b16 %v754, %v744
  %v985 = vpack.c.b16 %v755, %v745
  %v986 = vpack.c.b16 %v756, %v746
  %v987 = vpack.c.b16 %v757, %v747
  %v988 = vpack.c.b16 %v768, %v758
  %v989 = vpack.c.b16 %v769, %v759
  %v990 = vpack.c.b16 %v770, %v760
  %v991 = vpack.c.b16 %v771, %v761
  %v992 = vpack.c.b16 %v772, %v762
  %v993 = vpack.c.b16 %v773, %v763
  %v994 = vpack.c.b16 %v774, %v764
  %v995 = vpack.c.b16 %v775, %v765
  %v996 = vpack.c.b16 %v776, %v766
  %v997 = vpack.c.b16 %v777, %v767
  %v998 = vpack.c.b16 %v788, %v778
  %v999 = vpack.c.b16 %v789, %v779
  %v1000 = vpack.c.b16 %v790, %v780
  %v1001 = vpack.c.b16 %v791, %v781
  %v1002 = vpack.c.b16 %v792, %v782
  %v1003 = vpack.c.b16 %v793, %v783
  %v1004 = vpack.c.b16 %v794, %v784
  %v1005 = vpack.c.b16 %v795, %v785
  %v1006 = vpack.c.b16 %v796, %v786
  %v1007 = vpack.c.b16 %v797, %v787
  %v1008 = vpack.c.b16 %v808, %v798
  %v1009 = vpack.c.b16 %v809, %v799
  %v1010 = vpack.c.b16 %v810, %v800
  %v1011 = vpack.c.b16 %v811, %v801
  %v1012 = vpack.c.b16 %v812, %v802
  %v1013 = vpack.c.b16 %v813, %v803
  %v1014 = vpack.c.b16 %v814, %v804
  %v1015 = vpack.c.b16 %v815, %v805
  %v1016 = vpack.c.b16 %v816, %v806
  %v1017 = vpack.c.b16 %v817, %v807
  %v1018 = vpack.c.b16 %v828, %v818
  %v1019 = vpack.c.b16 %v829, %v819
  %v1020 = vpack.c.b16 %v830, %v820
  %v1021 = vpack.c.b16 %v831, %v821
  %v1022 = vpack.c.b16 %v832, %v822
  %v1023 = vpack.c.b16 %v833, %v823
  %v1024 = vpack.c.b16 %v834, %v824
  %v1025 = vpack.c.b16 %v835, %v825
  %v1026 = vpack.c.b16 %v836, %v826
  %v1027 = vpack.c.b16 %v837, %v827
  %v1028 = vpack.c.b16 %v848, %v838
  %v1029 = vpack.c.b16 %v849, %v839
  %v1030 = vpack.c.b16 %v850, %v840
  %v1031 = vpack.c.b16 %v851, %v841
  %v1032 = vpack.c.b16 %v852, %v842
  %v1033 = vpack.c.b16 %v853, %v843
  %v1034 = vpack.c.b16 %v854, %v844
  %v1035 = vpack.c.b16 %v855, %v845
  %v1036 = vpack.c.b16 %v856, %v846
  %v1037 = vpack.c.b16 %v857, %v847
  %v1038 = vpack.c.b16 %v868, %v858
  %v1039 = vpack.c.b16 %v869, %v859
  %v1040 = vpack.c.b16 %v870, %v860
  %v1041 = vpack.c.b16 %v871, %v861
  %v1042 = vpack.c.b16 %v872, %v862
  %v1043 = vpack.c.b16 %v873, %v863
  %v1044 = vpack.c.b16 %v874, %v864
  %v1045 = vpack.c.b16 %v875, %v865
  %v1046 = vpack.c.b16 %v876, %v866
  %v1047 = vpack.c.b16 %v877, %v867
  %v1048 = vpack.c.b16 %v888, %v878
  %v1049 = vpack.c.b16 %v889, %v879
  %v1050 = vpack.c.b16 %v890, %v880
  %v1051 = vpack.c.b16 %v891, %v881
  %v1052 = vpack.c.b16 %v892, %v882
  %v1053 = vpack.c.b16 %v893, %v883
  %v1054 = vpack.c.b16 %v894, %v884
  %v1055 = vpack.c.b16 %v895, %v885
  %v1056 = vpack.c.b16 %v896, %v886
  %v1057 = vpack.c.b16 %v897, %v887
  %v1058 = vpack.c.b16 %v908, %v898
  %v1059 = vpack.c.b16 %v909, %v899
  %v1060 = vpack.c.b16 %v910, %v900
  %v1061 = vpack.c.b16 %v911, %v901
  %v1062 = vpack.c.b16 %v912, %v902
  %v1063 = vpack.c.b16 %v913, %v903
  %v1064 = vpack.c.b16 %v914, %v904
  %v1065 = vpack.c.b16 %v915, %v905
  %v1066 = vpack.c.b16 %v916, %v906
  %v1067 = vpack.c.b16 %v917, %v907
  %v1068 = vpack.c.b16 %v928, %v918
  %v1069 = vpack.c.b16 %v929, %v919
  %v1070 = vpack.c.b16 %v930, %v920
  %v1071 = vpack.c.b16 %v931, %v921
  %v1072 = vpack.c.b16 %v932, %v922
  %v1073 = vpack.c.b16 %v933, %v923
  %v1074 = vpack.c.b16 %v934, %v924
  %v1075 = vpack.c.b16 %v935, %v925
  %v1076 = vpack.c.b16 %v936, %v926
  %v1077 = vpack.c.b16 %v937, %v927
  %v1078 = vpack.c.b16 %v948, %v938
  %v1079 = vpack.c.b16 %v949, %v939
  %v1080 = vpack.c.b16 %v950, %v940
  %v1081 = vpack.c.b16 %v951, %v941
  %v1082 = vpack.c.b16 %v952, %v942
  %v1083 = vpack.c.b16 %v953, %v943
  %v1084 = vpack.c.b16 %v954, %v944
  %v1085 = vpack.c.b16 %v955, %v945
  %v1086 = vpack.c.b16 %v956, %v946
  %v1087 = vpack.c.b16 %v957, %v947
  %v1088 = vpack.c.b16 %v958, %v958
  %v1089 = vpack.c.b16 %v959, %v959
  %v1090 = vpack.c.b16 %v960, %v960
  %v1091 = vpack.c.b16 %v961, %v961
  %v1092 = vpack.c.b16 %v962, %v962
  %v1093 = vpack.c.b16 %v963, %v963
  %v1094 = vpack.c.b16 %v964, %v964
  %v1095 = vpack.c.b16 %v965, %v965
  %v1096 = vpack.c.b16 %v966, %v966
  %v1097 = vpack.c.b16 %v967, %v967
  %vm1215 = vcmask 392192
  %v1217 = vsel %vm1215, %v977, 0
  %v1220 = vsel %vm1215, %v987, 0
  %v1223 = vsel %vm1215, %v997, 0
  %v1226 = vsel %vm1215, %v1007, 0
  %v1229 = vsel %vm1215, %v1017, 0
  %v1232 = vsel %vm1215, %v1027, 0
  %v1235 = vsel %vm1215, %v1037, 0
  %v1238 = vsel %vm1215, %v1047, 0
  %v1241 = vsel %vm1215, %v1057, 0
  %v1244 = vsel %vm1215, %v1067, 0
  %v1247 = vsel %vm1215, %v1077, 0
  %v1250 = vsel %vm1215, %v1087, 0
  %v1253 = vsel %vm1215, %v1097, 0
  %1255 = vmatprep.subr.bf16.mxu0 %v333
  %1256 = vmatpush1.bf16.msra.mxu0 %v332
  %1257 = vmatprep.subr.bf16.mxu0 %v331
  %1258 = vmatpush1.bf16.msra.mxu0 %v330
  %1259 = vmatprep.subr.bf16.mxu0 %v329
  %1260 = vmatpush1.bf16.msra.mxu0 %v328
  %1261 = vmatprep.subr.bf16.mxu0 %v327
  %1262 = vmatpush1.bf16.msra.mxu0 %v326
  %1263 = vmatprep.subr.bf16.mxu0 %v325
  %1264 = vmatpush1.bf16.msra.mxu0 %v324
  %1265 = vmatprep.subr.bf16.mxu0 %v323
  %1266 = vmatpush1.bf16.msra.mxu0 %v322
  %1267 = vmatprep.subr.bf16.mxu0 %v321
  %1268 = vmatpush1.bf16.msra.mxu0 %v320
  %1269 = vmatprep.subr.bf16.mxu0 %v319
  %1270 = vmatpush1.bf16.msra.mxu0 %v318
  %1271 = vmatprep.subr.bf16.mxu0 %v349
  %1272 = vmatpush2.bf16.msra.mxu0 %v348
  %1273 = vmatprep.subr.bf16.mxu0 %v347
  %1274 = vmatpush2.bf16.msra.mxu0 %v346
  %1275 = vmatprep.subr.bf16.mxu0 %v345
  %1276 = vmatpush2.bf16.msra.mxu0 %v344
  %1277 = vmatprep.subr.bf16.mxu0 %v343
  %1278 = vmatpush2.bf16.msra.mxu0 %v342
  %1279 = vmatprep.subr.bf16.mxu0 %v341
  %1280 = vmatpush2.bf16.msra.mxu0 %v340
  %1281 = vmatprep.subr.bf16.mxu0 %v339
  %1282 = vmatpush2.bf16.msra.mxu0 %v338
  %1283 = vmatprep.subr.bf16.mxu0 %v337
  %1284 = vmatpush2.bf16.msra.mxu0 %v336
  %1285 = vmatprep.subr.bf16.mxu0 %v335
  %1286 = vmatpush2.bf16.msra.mxu0 %v334
  %1287 = vmatprep.mubr.bf16.mxu0 %v969
  %1288 = vmatmul.mubr.bf16.gmra.mxu0 %v968
  %v1289 = vpop.f32.mrf.mxu0
  %v1290 = vadd.f32 0.0, %v1289
  %v1291 = vpop.f32.mrf.mxu0
  %v1292 = vadd.f32 0.0, %v1291
  %v1293 = vpop.f32.mrf.mxu0
  %v1294 = vadd.f32 0.0, %v1293
  %v1295 = vpop.f32.mrf.mxu0
  %v1296 = vadd.f32 0.0, %v1295
  %1297 = vmatprep.mubr.bf16.mxu0 %v979
  %1298 = vmatmul.mubr.bf16.gmra.mxu0 %v978
  %v1299 = vpop.f32.mrf.mxu0
  %v1300 = vadd.f32 0.0, %v1299
  %v1301 = vpop.f32.mrf.mxu0
  %v1302 = vadd.f32 0.0, %v1301
  %v1303 = vpop.f32.mrf.mxu0
  %v1304 = vadd.f32 0.0, %v1303
  %v1305 = vpop.f32.mrf.mxu0
  %v1306 = vadd.f32 0.0, %v1305
  %1307 = vmatprep.mubr.bf16.mxu0 %v989
  %1308 = vmatmul.mubr.bf16.gmra.mxu0 %v988
  %v1309 = vpop.f32.mrf.mxu0
  %v1310 = vadd.f32 0.0, %v1309
  %v1311 = vpop.f32.mrf.mxu0
  %v1312 = vadd.f32 0.0, %v1311
  %v1313 = vpop.f32.mrf.mxu0
  %v1314 = vadd.f32 0.0, %v1313
  %v1315 = vpop.f32.mrf.mxu0
  %v1316 = vadd.f32 0.0, %v1315
  %1317 = vmatprep.mubr.bf16.mxu0 %v999
  %1318 = vmatmul.mubr.bf16.gmra.mxu0 %v998
  %v1319 = vpop.f32.mrf.mxu0
  %v1320 = vadd.f32 0.0, %v1319
  %v1321 = vpop.f32.mrf.mxu0
  %v1322 = vadd.f32 0.0, %v1321
  %v1323 = vpop.f32.mrf.mxu0
  %v1324 = vadd.f32 0.0, %v1323
  %v1325 = vpop.f32.mrf.mxu0
  %v1326 = vadd.f32 0.0, %v1325
  %1327 = vmatprep.mubr.bf16.mxu0 %v1009
  %1328 = vmatmul.mubr.bf16.gmra.mxu0 %v1008
  %v1329 = vpop.f32.mrf.mxu0
  %v1330 = vadd.f32 0.0, %v1329
  %v1331 = vpop.f32.mrf.mxu0
  %v1332 = vadd.f32 0.0, %v1331
  %v1333 = vpop.f32.mrf.mxu0
  %v1334 = vadd.f32 0.0, %v1333
  %v1335 = vpop.f32.mrf.mxu0
  %v1336 = vadd.f32 0.0, %v1335
  %1337 = vmatprep.mubr.bf16.mxu0 %v1019
  %1338 = vmatmul.mubr.bf16.gmra.mxu0 %v1018
  %v1339 = vpop.f32.mrf.mxu0
  %v1340 = vadd.f32 0.0, %v1339
  %v1341 = vpop.f32.mrf.mxu0
  %v1342 = vadd.f32 0.0, %v1341
  %v1343 = vpop.f32.mrf.mxu0
  %v1344 = vadd.f32 0.0, %v1343
  %v1345 = vpop.f32.mrf.mxu0
  %v1346 = vadd.f32 0.0, %v1345
  %1347 = vmatprep.mubr.bf16.mxu0 %v1029
  %1348 = vmatmul.mubr.bf16.gmra.mxu0 %v1028
  %v1349 = vpop.f32.mrf.mxu0
  %v1350 = vadd.f32 0.0, %v1349
  %v1351 = vpop.f32.mrf.mxu0
  %v1352 = vadd.f32 0.0, %v1351
  %v1353 = vpop.f32.mrf.mxu0
  %v1354 = vadd.f32 0.0, %v1353
  %v1355 = vpop.f32.mrf.mxu0
  %v1356 = vadd.f32 0.0, %v1355
  %1357 = vmatprep.mubr.bf16.mxu0 %v1039
  %1358 = vmatmul.mubr.bf16.gmra.mxu0 %v1038
  %v1359 = vpop.f32.mrf.mxu0
  %v1360 = vadd.f32 0.0, %v1359
  %v1361 = vpop.f32.mrf.mxu0
  %v1362 = vadd.f32 0.0, %v1361
  %v1363 = vpop.f32.mrf.mxu0
  %v1364 = vadd.f32 0.0, %v1363
  %v1365 = vpop.f32.mrf.mxu0
  %v1366 = vadd.f32 0.0, %v1365
  %1367 = vmatprep.mubr.bf16.mxu0 %v1049
  %1368 = vmatmul.mubr.bf16.gmra.mxu0 %v1048
  %v1369 = vpop.f32.mrf.mxu0
  %v1370 = vadd.f32 0.0, %v1369
  %v1371 = vpop.f32.mrf.mxu0
  %v1372 = vadd.f32 0.0, %v1371
  %v1373 = vpop.f32.mrf.mxu0
  %v1374 = vadd.f32 0.0, %v1373
  %v1375 = vpop.f32.mrf.mxu0
  %v1376 = vadd.f32 0.0, %v1375
  %1377 = vmatprep.mubr.bf16.mxu0 %v1059
  %1378 = vmatmul.mubr.bf16.gmra.mxu0 %v1058
  %v1379 = vpop.f32.mrf.mxu0
  %v1380 = vadd.f32 0.0, %v1379
  %v1381 = vpop.f32.mrf.mxu0
  %v1382 = vadd.f32 0.0, %v1381
  %v1383 = vpop.f32.mrf.mxu0
  %v1384 = vadd.f32 0.0, %v1383
  %v1385 = vpop.f32.mrf.mxu0
  %v1386 = vadd.f32 0.0, %v1385
  %1387 = vmatprep.mubr.bf16.mxu0 %v1069
  %1388 = vmatmul.mubr.bf16.gmra.mxu0 %v1068
  %v1389 = vpop.f32.mrf.mxu0
  %v1390 = vadd.f32 0.0, %v1389
  %v1391 = vpop.f32.mrf.mxu0
  %v1392 = vadd.f32 0.0, %v1391
  %v1393 = vpop.f32.mrf.mxu0
  %v1394 = vadd.f32 0.0, %v1393
  %v1395 = vpop.f32.mrf.mxu0
  %v1396 = vadd.f32 0.0, %v1395
  %1397 = vmatprep.mubr.bf16.mxu0 %v1079
  %1398 = vmatmul.mubr.bf16.gmra.mxu0 %v1078
  %v1399 = vpop.f32.mrf.mxu0
  %v1400 = vadd.f32 0.0, %v1399
  %v1401 = vpop.f32.mrf.mxu0
  %v1402 = vadd.f32 0.0, %v1401
  %v1403 = vpop.f32.mrf.mxu0
  %v1404 = vadd.f32 0.0, %v1403
  %v1405 = vpop.f32.mrf.mxu0
  %v1406 = vadd.f32 0.0, %v1405
  %1407 = vmatprep.mubr.bf16.mxu0 %v1089
  %1408 = vmatmul.mubr.bf16.gmra.mxu0 %v1088
  %v1409 = vpop.f32.mrf.mxu0
  %v1410 = vadd.f32 0.0, %v1409
  %v1411 = vpop.f32.mrf.mxu0
  %v1412 = vadd.f32 0.0, %v1411
  %v1413 = vpop.f32.mrf.mxu0
  %v1414 = vpop.f32.mrf.mxu0
  %1415 = vdwg.mxu0
  %1416 = vmatprep.subr.bf16.mxu0 %v365
  %1417 = vmatpush1.bf16.msra.mxu0 %v364
  %1418 = vmatprep.subr.bf16.mxu0 %v363
  %1419 = vmatpush1.bf16.msra.mxu0 %v362
  %1420 = vmatprep.subr.bf16.mxu0 %v361
  %1421 = vmatpush1.bf16.msra.mxu0 %v360
  %1422 = vmatprep.subr.bf16.mxu0 %v359
  %1423 = vmatpush1.bf16.msra.mxu0 %v358
  %1424 = vmatprep.subr.bf16.mxu0 %v357
  %1425 = vmatpush1.bf16.msra.mxu0 %v356
  %1426 = vmatprep.subr.bf16.mxu0 %v355
  %1427 = vmatpush1.bf16.msra.mxu0 %v354
  %1428 = vmatprep.subr.bf16.mxu0 %v353
  %1429 = vmatpush1.bf16.msra.mxu0 %v352
  %1430 = vmatprep.subr.bf16.mxu0 %v351
  %1431 = vmatpush1.bf16.msra.mxu0 %v350
  %1432 = vmatprep.subr.bf16.mxu0 %v381
  %1433 = vmatpush2.bf16.msra.mxu0 %v380
  %1434 = vmatprep.subr.bf16.mxu0 %v379
  %1435 = vmatpush2.bf16.msra.mxu0 %v378
  %1436 = vmatprep.subr.bf16.mxu0 %v377
  %1437 = vmatpush2.bf16.msra.mxu0 %v376
  %1438 = vmatprep.subr.bf16.mxu0 %v375
  %1439 = vmatpush2.bf16.msra.mxu0 %v374
  %1440 = vmatprep.subr.bf16.mxu0 %v373
  %1441 = vmatpush2.bf16.msra.mxu0 %v372
  %1442 = vmatprep.subr.bf16.mxu0 %v371
  %1443 = vmatpush2.bf16.msra.mxu0 %v370
  %1444 = vmatprep.subr.bf16.mxu0 %v369
  %1445 = vmatpush2.bf16.msra.mxu0 %v368
  %1446 = vmatprep.subr.bf16.mxu0 %v367
  %1447 = vmatpush2.bf16.msra.mxu0 %v366
  %1448 = vmatprep.mubr.bf16.mxu0 %v971
  %1449 = vmatmul.mubr.bf16.gmra.mxu0 %v970
  %v1450 = vpop.f32.mrf.mxu0
  %v1451 = vadd.f32 %v1290, %v1450
  %v1452 = vpop.f32.mrf.mxu0
  %v1453 = vadd.f32 %v1292, %v1452
  %v1454 = vpop.f32.mrf.mxu0
  %v1455 = vadd.f32 %v1294, %v1454
  %v1456 = vpop.f32.mrf.mxu0
  %v1457 = vadd.f32 %v1296, %v1456
  %1458 = vmatprep.mubr.bf16.mxu0 %v981
  %1459 = vmatmul.mubr.bf16.gmra.mxu0 %v980
  %v1460 = vpop.f32.mrf.mxu0
  %v1461 = vadd.f32 %v1300, %v1460
  %v1462 = vpop.f32.mrf.mxu0
  %v1463 = vadd.f32 %v1302, %v1462
  %v1464 = vpop.f32.mrf.mxu0
  %v1465 = vadd.f32 %v1304, %v1464
  %v1466 = vpop.f32.mrf.mxu0
  %v1467 = vadd.f32 %v1306, %v1466
  %1468 = vmatprep.mubr.bf16.mxu0 %v991
  %1469 = vmatmul.mubr.bf16.gmra.mxu0 %v990
  %v1470 = vpop.f32.mrf.mxu0
  %v1471 = vadd.f32 %v1310, %v1470
  %v1472 = vpop.f32.mrf.mxu0
  %v1473 = vadd.f32 %v1312, %v1472
  %v1474 = vpop.f32.mrf.mxu0
  %v1475 = vadd.f32 %v1314, %v1474
  %v1476 = vpop.f32.mrf.mxu0
  %v1477 = vadd.f32 %v1316, %v1476
  %1478 = vmatprep.mubr.bf16.mxu0 %v1001
  %1479 = vmatmul.mubr.bf16.gmra.mxu0 %v1000
  %v1480 = vpop.f32.mrf.mxu0
  %v1481 = vadd.f32 %v1320, %v1480
  %v1482 = vpop.f32.mrf.mxu0
  %v1483 = vadd.f32 %v1322, %v1482
  %v1484 = vpop.f32.mrf.mxu0
  %v1485 = vadd.f32 %v1324, %v1484
  %v1486 = vpop.f32.mrf.mxu0
  %v1487 = vadd.f32 %v1326, %v1486
  %1488 = vmatprep.mubr.bf16.mxu0 %v1011
  %1489 = vmatmul.mubr.bf16.gmra.mxu0 %v1010
  %v1490 = vpop.f32.mrf.mxu0
  %v1491 = vadd.f32 %v1330, %v1490
  %v1492 = vpop.f32.mrf.mxu0
  %v1493 = vadd.f32 %v1332, %v1492
  %v1494 = vpop.f32.mrf.mxu0
  %v1495 = vadd.f32 %v1334, %v1494
  %v1496 = vpop.f32.mrf.mxu0
  %v1497 = vadd.f32 %v1336, %v1496
  %1498 = vmatprep.mubr.bf16.mxu0 %v1021
  %1499 = vmatmul.mubr.bf16.gmra.mxu0 %v1020
  %v1500 = vpop.f32.mrf.mxu0
  %v1501 = vadd.f32 %v1340, %v1500
  %v1502 = vpop.f32.mrf.mxu0
  %v1503 = vadd.f32 %v1342, %v1502
  %v1504 = vpop.f32.mrf.mxu0
  %v1505 = vadd.f32 %v1344, %v1504
  %v1506 = vpop.f32.mrf.mxu0
  %v1507 = vadd.f32 %v1346, %v1506
  %1508 = vmatprep.mubr.bf16.mxu0 %v1031
  %1509 = vmatmul.mubr.bf16.gmra.mxu0 %v1030
  %v1510 = vpop.f32.mrf.mxu0
  %v1511 = vadd.f32 %v1350, %v1510
  %v1512 = vpop.f32.mrf.mxu0
  %v1513 = vadd.f32 %v1352, %v1512
  %v1514 = vpop.f32.mrf.mxu0
  %v1515 = vadd.f32 %v1354, %v1514
  %v1516 = vpop.f32.mrf.mxu0
  %v1517 = vadd.f32 %v1356, %v1516
  %1518 = vmatprep.mubr.bf16.mxu0 %v1041
  %1519 = vmatmul.mubr.bf16.gmra.mxu0 %v1040
  %v1520 = vpop.f32.mrf.mxu0
  %v1521 = vadd.f32 %v1360, %v1520
  %v1522 = vpop.f32.mrf.mxu0
  %v1523 = vadd.f32 %v1362, %v1522
  %v1524 = vpop.f32.mrf.mxu0
  %v1525 = vadd.f32 %v1364, %v1524
  %v1526 = vpop.f32.mrf.mxu0
  %v1527 = vadd.f32 %v1366, %v1526
  %1528 = vmatprep.mubr.bf16.mxu0 %v1051
  %1529 = vmatmul.mubr.bf16.gmra.mxu0 %v1050
  %v1530 = vpop.f32.mrf.mxu0
  %v1531 = vadd.f32 %v1370, %v1530
  %v1532 = vpop.f32.mrf.mxu0
  %v1533 = vadd.f32 %v1372, %v1532
  %v1534 = vpop.f32.mrf.mxu0
  %v1535 = vadd.f32 %v1374, %v1534
  %v1536 = vpop.f32.mrf.mxu0
  %v1537 = vadd.f32 %v1376, %v1536
  %1538 = vmatprep.mubr.bf16.mxu0 %v1061
  %1539 = vmatmul.mubr.bf16.gmra.mxu0 %v1060
  %v1540 = vpop.f32.mrf.mxu0
  %v1541 = vadd.f32 %v1380, %v1540
  %v1542 = vpop.f32.mrf.mxu0
  %v1543 = vadd.f32 %v1382, %v1542
  %v1544 = vpop.f32.mrf.mxu0
  %v1545 = vadd.f32 %v1384, %v1544
  %v1546 = vpop.f32.mrf.mxu0
  %v1547 = vadd.f32 %v1386, %v1546
  %1548 = vmatprep.mubr.bf16.mxu0 %v1071
  %1549 = vmatmul.mubr.bf16.gmra.mxu0 %v1070
  %v1550 = vpop.f32.mrf.mxu0
  %v1551 = vadd.f32 %v1390, %v1550
  %v1552 = vpop.f32.mrf.mxu0
  %v1553 = vadd.f32 %v1392, %v1552
  %v1554 = vpop.f32.mrf.mxu0
  %v1555 = vadd.f32 %v1394, %v1554
  %v1556 = vpop.f32.mrf.mxu0
  %v1557 = vadd.f32 %v1396, %v1556
  %1558 = vmatprep.mubr.bf16.mxu0 %v1081
  %1559 = vmatmul.mubr.bf16.gmra.mxu0 %v1080
  %v1560 = vpop.f32.mrf.mxu0
  %v1561 = vadd.f32 %v1400, %v1560
  %v1562 = vpop.f32.mrf.mxu0
  %v1563 = vadd.f32 %v1402, %v1562
  %v1564 = vpop.f32.mrf.mxu0
  %v1565 = vadd.f32 %v1404, %v1564
  %v1566 = vpop.f32.mrf.mxu0
  %v1567 = vadd.f32 %v1406, %v1566
  %1568 = vmatprep.mubr.bf16.mxu0 %v1091
  %1569 = vmatmul.mubr.bf16.gmra.mxu0 %v1090
  %v1570 = vpop.f32.mrf.mxu0
  %v1571 = vadd.f32 %v1410, %v1570
  %v1572 = vpop.f32.mrf.mxu0
  %v1573 = vadd.f32 %v1412, %v1572
  %v1574 = vpop.f32.mrf.mxu0
  %v1575 = vpop.f32.mrf.mxu0
  %1576 = vdwg.mxu0
  %1577 = vmatprep.subr.bf16.mxu0 %v397
  %1578 = vmatpush1.bf16.msra.mxu0 %v396
  %1579 = vmatprep.subr.bf16.mxu0 %v395
  %1580 = vmatpush1.bf16.msra.mxu0 %v394
  %1581 = vmatprep.subr.bf16.mxu0 %v393
  %1582 = vmatpush1.bf16.msra.mxu0 %v392
  %1583 = vmatprep.subr.bf16.mxu0 %v391
  %1584 = vmatpush1.bf16.msra.mxu0 %v390
  %1585 = vmatprep.subr.bf16.mxu0 %v389
  %1586 = vmatpush1.bf16.msra.mxu0 %v388
  %1587 = vmatprep.subr.bf16.mxu0 %v387
  %1588 = vmatpush1.bf16.msra.mxu0 %v386
  %1589 = vmatprep.subr.bf16.mxu0 %v385
  %1590 = vmatpush1.bf16.msra.mxu0 %v384
  %1591 = vmatprep.subr.bf16.mxu0 %v383
  %1592 = vmatpush1.bf16.msra.mxu0 %v382
  %1593 = vmatprep.subr.bf16.mxu0 %v413
  %1594 = vmatpush2.bf16.msra.mxu0 %v412
  %1595 = vmatprep.subr.bf16.mxu0 %v411
  %1596 = vmatpush2.bf16.msra.mxu0 %v410
  %1597 = vmatprep.subr.bf16.mxu0 %v409
  %1598 = vmatpush2.bf16.msra.mxu0 %v408
  %1599 = vmatprep.subr.bf16.mxu0 %v407
  %1600 = vmatpush2.bf16.msra.mxu0 %v406
  %1601 = vmatprep.subr.bf16.mxu0 %v405
  %1602 = vmatpush2.bf16.msra.mxu0 %v404
  %1603 = vmatprep.subr.bf16.mxu0 %v403
  %1604 = vmatpush2.bf16.msra.mxu0 %v402
  %1605 = vmatprep.subr.bf16.mxu0 %v401
  %1606 = vmatpush2.bf16.msra.mxu0 %v400
  %1607 = vmatprep.subr.bf16.mxu0 %v399
  %1608 = vmatpush2.bf16.msra.mxu0 %v398
  %1609 = vmatprep.mubr.bf16.mxu0 %v973
  %1610 = vmatmul.mubr.bf16.gmra.mxu0 %v972
  %v1611 = vpop.f32.mrf.mxu0
  %v1612 = vadd.f32 %v1451, %v1611
  %v1613 = vpop.f32.mrf.mxu0
  %v1614 = vadd.f32 %v1453, %v1613
  %v1615 = vpop.f32.mrf.mxu0
  %v1616 = vadd.f32 %v1455, %v1615
  %v1617 = vpop.f32.mrf.mxu0
  %v1618 = vadd.f32 %v1457, %v1617
  %1619 = vmatprep.mubr.bf16.mxu0 %v983
  %1620 = vmatmul.mubr.bf16.gmra.mxu0 %v982
  %v1621 = vpop.f32.mrf.mxu0
  %v1622 = vadd.f32 %v1461, %v1621
  %v1623 = vpop.f32.mrf.mxu0
  %v1624 = vadd.f32 %v1463, %v1623
  %v1625 = vpop.f32.mrf.mxu0
  %v1626 = vadd.f32 %v1465, %v1625
  %v1627 = vpop.f32.mrf.mxu0
  %v1628 = vadd.f32 %v1467, %v1627
  %1629 = vmatprep.mubr.bf16.mxu0 %v993
  %1630 = vmatmul.mubr.bf16.gmra.mxu0 %v992
  %v1631 = vpop.f32.mrf.mxu0
  %v1632 = vadd.f32 %v1471, %v1631
  %v1633 = vpop.f32.mrf.mxu0
  %v1634 = vadd.f32 %v1473, %v1633
  %v1635 = vpop.f32.mrf.mxu0
  %v1636 = vadd.f32 %v1475, %v1635
  %v1637 = vpop.f32.mrf.mxu0
  %v1638 = vadd.f32 %v1477, %v1637
  %1639 = vmatprep.mubr.bf16.mxu0 %v1003
  %1640 = vmatmul.mubr.bf16.gmra.mxu0 %v1002
  %v1641 = vpop.f32.mrf.mxu0
  %v1642 = vadd.f32 %v1481, %v1641
  %v1643 = vpop.f32.mrf.mxu0
  %v1644 = vadd.f32 %v1483, %v1643
  %v1645 = vpop.f32.mrf.mxu0
  %v1646 = vadd.f32 %v1485, %v1645
  %v1647 = vpop.f32.mrf.mxu0
  %v1648 = vadd.f32 %v1487, %v1647
  %1649 = vmatprep.mubr.bf16.mxu0 %v1013
  %1650 = vmatmul.mubr.bf16.gmra.mxu0 %v1012
  %v1651 = vpop.f32.mrf.mxu0
  %v1652 = vadd.f32 %v1491, %v1651
  %v1653 = vpop.f32.mrf.mxu0
  %v1654 = vadd.f32 %v1493, %v1653
  %v1655 = vpop.f32.mrf.mxu0
  %v1656 = vadd.f32 %v1495, %v1655
  %v1657 = vpop.f32.mrf.mxu0
  %v1658 = vadd.f32 %v1497, %v1657
  %1659 = vmatprep.mubr.bf16.mxu0 %v1023
  %1660 = vmatmul.mubr.bf16.gmra.mxu0 %v1022
  %v1661 = vpop.f32.mrf.mxu0
  %v1662 = vadd.f32 %v1501, %v1661
  %v1663 = vpop.f32.mrf.mxu0
  %v1664 = vadd.f32 %v1503, %v1663
  %v1665 = vpop.f32.mrf.mxu0
  %v1666 = vadd.f32 %v1505, %v1665
  %v1667 = vpop.f32.mrf.mxu0
  %v1668 = vadd.f32 %v1507, %v1667
  %1669 = vmatprep.mubr.bf16.mxu0 %v1033
  %1670 = vmatmul.mubr.bf16.gmra.mxu0 %v1032
  %v1671 = vpop.f32.mrf.mxu0
  %v1672 = vadd.f32 %v1511, %v1671
  %v1673 = vpop.f32.mrf.mxu0
  %v1674 = vadd.f32 %v1513, %v1673
  %v1675 = vpop.f32.mrf.mxu0
  %v1676 = vadd.f32 %v1515, %v1675
  %v1677 = vpop.f32.mrf.mxu0
  %v1678 = vadd.f32 %v1517, %v1677
  %1679 = vmatprep.mubr.bf16.mxu0 %v1043
  %1680 = vmatmul.mubr.bf16.gmra.mxu0 %v1042
  %v1681 = vpop.f32.mrf.mxu0
  %v1682 = vadd.f32 %v1521, %v1681
  %v1683 = vpop.f32.mrf.mxu0
  %v1684 = vadd.f32 %v1523, %v1683
  %v1685 = vpop.f32.mrf.mxu0
  %v1686 = vadd.f32 %v1525, %v1685
  %v1687 = vpop.f32.mrf.mxu0
  %v1688 = vadd.f32 %v1527, %v1687
  %1689 = vmatprep.mubr.bf16.mxu0 %v1053
  %1690 = vmatmul.mubr.bf16.gmra.mxu0 %v1052
  %v1691 = vpop.f32.mrf.mxu0
  %v1692 = vadd.f32 %v1531, %v1691
  %v1693 = vpop.f32.mrf.mxu0
  %v1694 = vadd.f32 %v1533, %v1693
  %v1695 = vpop.f32.mrf.mxu0
  %v1696 = vadd.f32 %v1535, %v1695
  %v1697 = vpop.f32.mrf.mxu0
  %v1698 = vadd.f32 %v1537, %v1697
  %1699 = vmatprep.mubr.bf16.mxu0 %v1063
  %1700 = vmatmul.mubr.bf16.gmra.mxu0 %v1062
  %v1701 = vpop.f32.mrf.mxu0
  %v1702 = vadd.f32 %v1541, %v1701
  %v1703 = vpop.f32.mrf.mxu0
  %v1704 = vadd.f32 %v1543, %v1703
  %v1705 = vpop.f32.mrf.mxu0
  %v1706 = vadd.f32 %v1545, %v1705
  %v1707 = vpop.f32.mrf.mxu0
  %v1708 = vadd.f32 %v1547, %v1707
  %1709 = vmatprep.mubr.bf16.mxu0 %v1073
  %1710 = vmatmul.mubr.bf16.gmra.mxu0 %v1072
  %v1711 = vpop.f32.mrf.mxu0
  %v1712 = vadd.f32 %v1551, %v1711
  %v1713 = vpop.f32.mrf.mxu0
  %v1714 = vadd.f32 %v1553, %v1713
  %v1715 = vpop.f32.mrf.mxu0
  %v1716 = vadd.f32 %v1555, %v1715
  %v1717 = vpop.f32.mrf.mxu0
  %v1718 = vadd.f32 %v1557, %v1717
  %1719 = vmatprep.mubr.bf16.mxu0 %v1083
  %1720 = vmatmul.mubr.bf16.gmra.mxu0 %v1082
  %v1721 = vpop.f32.mrf.mxu0
  %v1722 = vadd.f32 %v1561, %v1721
  %v1723 = vpop.f32.mrf.mxu0
  %v1724 = vadd.f32 %v1563, %v1723
  %v1725 = vpop.f32.mrf.mxu0
  %v1726 = vadd.f32 %v1565, %v1725
  %v1727 = vpop.f32.mrf.mxu0
  %v1728 = vadd.f32 %v1567, %v1727
  %1729 = vmatprep.mubr.bf16.mxu0 %v1093
  %1730 = vmatmul.mubr.bf16.gmra.mxu0 %v1092
  %v1731 = vpop.f32.mrf.mxu0
  %v1732 = vadd.f32 %v1571, %v1731
  %v1733 = vpop.f32.mrf.mxu0
  %v1734 = vadd.f32 %v1573, %v1733
  %v1735 = vpop.f32.mrf.mxu0
  %v1736 = vpop.f32.mrf.mxu0
  %1737 = vdwg.mxu0
  %1738 = vmatprep.subr.bf16.mxu0 %v429
  %1739 = vmatpush1.bf16.msra.mxu0 %v428
  %1740 = vmatprep.subr.bf16.mxu0 %v427
  %1741 = vmatpush1.bf16.msra.mxu0 %v426
  %1742 = vmatprep.subr.bf16.mxu0 %v425
  %1743 = vmatpush1.bf16.msra.mxu0 %v424
  %1744 = vmatprep.subr.bf16.mxu0 %v423
  %1745 = vmatpush1.bf16.msra.mxu0 %v422
  %1746 = vmatprep.subr.bf16.mxu0 %v421
  %1747 = vmatpush1.bf16.msra.mxu0 %v420
  %1748 = vmatprep.subr.bf16.mxu0 %v419
  %1749 = vmatpush1.bf16.msra.mxu0 %v418
  %1750 = vmatprep.subr.bf16.mxu0 %v417
  %1751 = vmatpush1.bf16.msra.mxu0 %v416
  %1752 = vmatprep.subr.bf16.mxu0 %v415
  %1753 = vmatpush1.bf16.msra.mxu0 %v414
  %1754 = vmatprep.subr.bf16.mxu0 %v445
  %1755 = vmatpush2.bf16.msra.mxu0 %v444
  %1756 = vmatprep.subr.bf16.mxu0 %v443
  %1757 = vmatpush2.bf16.msra.mxu0 %v442
  %1758 = vmatprep.subr.bf16.mxu0 %v441
  %1759 = vmatpush2.bf16.msra.mxu0 %v440
  %1760 = vmatprep.subr.bf16.mxu0 %v439
  %1761 = vmatpush2.bf16.msra.mxu0 %v438
  %1762 = vmatprep.subr.bf16.mxu0 %v437
  %1763 = vmatpush2.bf16.msra.mxu0 %v436
  %1764 = vmatprep.subr.bf16.mxu0 %v435
  %1765 = vmatpush2.bf16.msra.mxu0 %v434
  %1766 = vmatprep.subr.bf16.mxu0 %v433
  %1767 = vmatpush2.bf16.msra.mxu0 %v432
  %1768 = vmatprep.subr.bf16.mxu0 %v431
  %1769 = vmatpush2.bf16.msra.mxu0 %v430
  %1770 = vmatprep.mubr.bf16.mxu0 %v975
  %1771 = vmatmul.mubr.bf16.gmra.mxu0 %v974
  %v1772 = vpop.f32.mrf.mxu0
  %v1773 = vadd.f32 %v1612, %v1772
  %v1774 = vpop.f32.mrf.mxu0
  %v1775 = vadd.f32 %v1614, %v1774
  %v1776 = vpop.f32.mrf.mxu0
  %v1777 = vadd.f32 %v1616, %v1776
  %v1778 = vpop.f32.mrf.mxu0
  %v1779 = vadd.f32 %v1618, %v1778
  %1780 = vmatprep.mubr.bf16.mxu0 %v985
  %1781 = vmatmul.mubr.bf16.gmra.mxu0 %v984
  %v1782 = vpop.f32.mrf.mxu0
  %v1783 = vadd.f32 %v1622, %v1782
  %v1784 = vpop.f32.mrf.mxu0
  %v1785 = vadd.f32 %v1624, %v1784
  %v1786 = vpop.f32.mrf.mxu0
  %v1787 = vadd.f32 %v1626, %v1786
  %v1788 = vpop.f32.mrf.mxu0
  %v1789 = vadd.f32 %v1628, %v1788
  %1790 = vmatprep.mubr.bf16.mxu0 %v995
  %1791 = vmatmul.mubr.bf16.gmra.mxu0 %v994
  %v1792 = vpop.f32.mrf.mxu0
  %v1793 = vadd.f32 %v1632, %v1792
  %v1794 = vpop.f32.mrf.mxu0
  %v1795 = vadd.f32 %v1634, %v1794
  %v1796 = vpop.f32.mrf.mxu0
  %v1797 = vadd.f32 %v1636, %v1796
  %v1798 = vpop.f32.mrf.mxu0
  %v1799 = vadd.f32 %v1638, %v1798
  %1800 = vmatprep.mubr.bf16.mxu0 %v1005
  %1801 = vmatmul.mubr.bf16.gmra.mxu0 %v1004
  %v1802 = vpop.f32.mrf.mxu0
  %v1803 = vadd.f32 %v1642, %v1802
  %v1804 = vpop.f32.mrf.mxu0
  %v1805 = vadd.f32 %v1644, %v1804
  %v1806 = vpop.f32.mrf.mxu0
  %v1807 = vadd.f32 %v1646, %v1806
  %v1808 = vpop.f32.mrf.mxu0
  %v1809 = vadd.f32 %v1648, %v1808
  %1810 = vmatprep.mubr.bf16.mxu0 %v1015
  %1811 = vmatmul.mubr.bf16.gmra.mxu0 %v1014
  %v1812 = vpop.f32.mrf.mxu0
  %v1813 = vadd.f32 %v1652, %v1812
  %v1814 = vpop.f32.mrf.mxu0
  %v1815 = vadd.f32 %v1654, %v1814
  %v1816 = vpop.f32.mrf.mxu0
  %v1817 = vadd.f32 %v1656, %v1816
  %v1818 = vpop.f32.mrf.mxu0
  %v1819 = vadd.f32 %v1658, %v1818
  %1820 = vmatprep.mubr.bf16.mxu0 %v1025
  %1821 = vmatmul.mubr.bf16.gmra.mxu0 %v1024
  %v1822 = vpop.f32.mrf.mxu0
  %v1823 = vadd.f32 %v1662, %v1822
  %v1824 = vpop.f32.mrf.mxu0
  %v1825 = vadd.f32 %v1664, %v1824
  %v1826 = vpop.f32.mrf.mxu0
  %v1827 = vadd.f32 %v1666, %v1826
  %v1828 = vpop.f32.mrf.mxu0
  %v1829 = vadd.f32 %v1668, %v1828
  %1830 = vmatprep.mubr.bf16.mxu0 %v1035
  %1831 = vmatmul.mubr.bf16.gmra.mxu0 %v1034
  %v1832 = vpop.f32.mrf.mxu0
  %v1833 = vadd.f32 %v1672, %v1832
  %v1834 = vpop.f32.mrf.mxu0
  %v1835 = vadd.f32 %v1674, %v1834
  %v1836 = vpop.f32.mrf.mxu0
  %v1837 = vadd.f32 %v1676, %v1836
  %v1838 = vpop.f32.mrf.mxu0
  %v1839 = vadd.f32 %v1678, %v1838
  %1840 = vmatprep.mubr.bf16.mxu0 %v1045
  %1841 = vmatmul.mubr.bf16.gmra.mxu0 %v1044
  %v1842 = vpop.f32.mrf.mxu0
  %v1843 = vadd.f32 %v1682, %v1842
  %v1844 = vpop.f32.mrf.mxu0
  %v1845 = vadd.f32 %v1684, %v1844
  %v1846 = vpop.f32.mrf.mxu0
  %v1847 = vadd.f32 %v1686, %v1846
  %v1848 = vpop.f32.mrf.mxu0
  %v1849 = vadd.f32 %v1688, %v1848
  %1850 = vmatprep.mubr.bf16.mxu0 %v1055
  %1851 = vmatmul.mubr.bf16.gmra.mxu0 %v1054
  %v1852 = vpop.f32.mrf.mxu0
  %v1853 = vadd.f32 %v1692, %v1852
  %v1854 = vpop.f32.mrf.mxu0
  %v1855 = vadd.f32 %v1694, %v1854
  %v1856 = vpop.f32.mrf.mxu0
  %v1857 = vadd.f32 %v1696, %v1856
  %v1858 = vpop.f32.mrf.mxu0
  %v1859 = vadd.f32 %v1698, %v1858
  %1860 = vmatprep.mubr.bf16.mxu0 %v1065
  %1861 = vmatmul.mubr.bf16.gmra.mxu0 %v1064
  %v1862 = vpop.f32.mrf.mxu0
  %v1863 = vadd.f32 %v1702, %v1862
  %v1864 = vpop.f32.mrf.mxu0
  %v1865 = vadd.f32 %v1704, %v1864
  %v1866 = vpop.f32.mrf.mxu0
  %v1867 = vadd.f32 %v1706, %v1866
  %v1868 = vpop.f32.mrf.mxu0
  %v1869 = vadd.f32 %v1708, %v1868
  %1870 = vmatprep.mubr.bf16.mxu0 %v1075
  %1871 = vmatmul.mubr.bf16.gmra.mxu0 %v1074
  %v1872 = vpop.f32.mrf.mxu0
  %v1873 = vadd.f32 %v1712, %v1872
  %v1874 = vpop.f32.mrf.mxu0
  %v1875 = vadd.f32 %v1714, %v1874
  %v1876 = vpop.f32.mrf.mxu0
  %v1877 = vadd.f32 %v1716, %v1876
  %v1878 = vpop.f32.mrf.mxu0
  %v1879 = vadd.f32 %v1718, %v1878
  %1880 = vmatprep.mubr.bf16.mxu0 %v1085
  %1881 = vmatmul.mubr.bf16.gmra.mxu0 %v1084
  %v1882 = vpop.f32.mrf.mxu0
  %v1883 = vadd.f32 %v1722, %v1882
  %v1884 = vpop.f32.mrf.mxu0
  %v1885 = vadd.f32 %v1724, %v1884
  %v1886 = vpop.f32.mrf.mxu0
  %v1887 = vadd.f32 %v1726, %v1886
  %v1888 = vpop.f32.mrf.mxu0
  %v1889 = vadd.f32 %v1728, %v1888
  %1890 = vmatprep.mubr.bf16.mxu0 %v1095
  %1891 = vmatmul.mubr.bf16.gmra.mxu0 %v1094
  %v1892 = vpop.f32.mrf.mxu0
  %v1893 = vadd.f32 %v1732, %v1892
  %v1894 = vpop.f32.mrf.mxu0
  %v1895 = vadd.f32 %v1734, %v1894
  %v1896 = vpop.f32.mrf.mxu0
  %v1897 = vpop.f32.mrf.mxu0
  %1898 = vdwg.mxu0
  %1899 = vmatprep.subr.bf16.mxu0 %v461
  %1900 = vmatpush1.bf16.msra.mxu0 %v460
  %1901 = vmatprep.subr.bf16.mxu0 %v459
  %1902 = vmatpush1.bf16.msra.mxu0 %v458
  %1903 = vmatprep.subr.bf16.mxu0 %v457
  %1904 = vmatpush1.bf16.msra.mxu0 %v456
  %1905 = vmatprep.subr.bf16.mxu0 %v455
  %1906 = vmatpush1.bf16.msra.mxu0 %v454
  %1907 = vmatprep.subr.bf16.mxu0 %v453
  %1908 = vmatpush1.bf16.msra.mxu0 %v452
  %1909 = vmatprep.subr.bf16.mxu0 %v451
  %1910 = vmatpush1.bf16.msra.mxu0 %v450
  %1911 = vmatprep.subr.bf16.mxu0 %v449
  %1912 = vmatpush1.bf16.msra.mxu0 %v448
  %1913 = vmatprep.subr.bf16.mxu0 %v447
  %1914 = vmatpush1.bf16.msra.mxu0 %v446
  %1915 = vmatprep.subr.bf16.mxu0 0
  %1916 = vmatpush2.bf16.msra.mxu0 0
  %1917 = vmatprep.subr.bf16.mxu0 0
  %1918 = vmatpush2.bf16.msra.mxu0 0
  %1919 = vmatprep.subr.bf16.mxu0 0
  %1920 = vmatpush2.bf16.msra.mxu0 0
  %1921 = vmatprep.subr.bf16.mxu0 0
  %1922 = vmatpush2.bf16.msra.mxu0 0
  %1923 = vmatprep.subr.bf16.mxu0 0
  %1924 = vmatpush2.bf16.msra.mxu0 0
  %1925 = vmatprep.subr.bf16.mxu0 %v467
  %1926 = vmatpush2.bf16.msra.mxu0 %v466
  %1927 = vmatprep.subr.bf16.mxu0 %v465
  %1928 = vmatpush2.bf16.msra.mxu0 %v464
  %1929 = vmatprep.subr.bf16.mxu0 %v463
  %1930 = vmatpush2.bf16.msra.mxu0 %v462
  %1931 = vmatprep.mubr.bf16.mxu0 %v1217
  %1932 = vmatmul.mubr.bf16.gmra.mxu0 %v976
  %v1933 = vpop.f32.mrf.mxu0
  %v1934 = vadd.f32 %v1773, %v1933
  %v1935 = vpop.f32.mrf.mxu0
  %v1936 = vadd.f32 %v1775, %v1935
  %v1937 = vpop.f32.mrf.mxu0
  %v1938 = vadd.f32 %v1777, %v1937
  %v1939 = vpop.f32.mrf.mxu0
  %v1940 = vadd.f32 %v1779, %v1939
  %1941 = vmatprep.mubr.bf16.mxu0 %v1220
  %1942 = vmatmul.mubr.bf16.gmra.mxu0 %v986
  %v1943 = vpop.f32.mrf.mxu0
  %v1944 = vadd.f32 %v1783, %v1943
  %v1945 = vpop.f32.mrf.mxu0
  %v1946 = vadd.f32 %v1785, %v1945
  %v1947 = vpop.f32.mrf.mxu0
  %v1948 = vadd.f32 %v1787, %v1947
  %v1949 = vpop.f32.mrf.mxu0
  %v1950 = vadd.f32 %v1789, %v1949
  %1951 = vmatprep.mubr.bf16.mxu0 %v1223
  %1952 = vmatmul.mubr.bf16.gmra.mxu0 %v996
  %v1953 = vpop.f32.mrf.mxu0
  %v1954 = vadd.f32 %v1793, %v1953
  %v1955 = vpop.f32.mrf.mxu0
  %v1956 = vadd.f32 %v1795, %v1955
  %v1957 = vpop.f32.mrf.mxu0
  %v1958 = vadd.f32 %v1797, %v1957
  %v1959 = vpop.f32.mrf.mxu0
  %v1960 = vadd.f32 %v1799, %v1959
  %1961 = vmatprep.mubr.bf16.mxu0 %v1226
  %1962 = vmatmul.mubr.bf16.gmra.mxu0 %v1006
  %v1963 = vpop.f32.mrf.mxu0
  %v1964 = vadd.f32 %v1803, %v1963
  %v1965 = vpop.f32.mrf.mxu0
  %v1966 = vadd.f32 %v1805, %v1965
  %v1967 = vpop.f32.mrf.mxu0
  %v1968 = vadd.f32 %v1807, %v1967
  %v1969 = vpop.f32.mrf.mxu0
  %v1970 = vadd.f32 %v1809, %v1969
  %1971 = vmatprep.mubr.bf16.mxu0 %v1229
  %1972 = vmatmul.mubr.bf16.gmra.mxu0 %v1016
  %v1973 = vpop.f32.mrf.mxu0
  %v1974 = vadd.f32 %v1813, %v1973
  %v1975 = vpop.f32.mrf.mxu0
  %v1976 = vadd.f32 %v1815, %v1975
  %v1977 = vpop.f32.mrf.mxu0
  %v1978 = vadd.f32 %v1817, %v1977
  %v1979 = vpop.f32.mrf.mxu0
  %v1980 = vadd.f32 %v1819, %v1979
  %1981 = vmatprep.mubr.bf16.mxu0 %v1232
  %1982 = vmatmul.mubr.bf16.gmra.mxu0 %v1026
  %v1983 = vpop.f32.mrf.mxu0
  %v1984 = vadd.f32 %v1823, %v1983
  %v1985 = vpop.f32.mrf.mxu0
  %v1986 = vadd.f32 %v1825, %v1985
  %v1987 = vpop.f32.mrf.mxu0
  %v1988 = vadd.f32 %v1827, %v1987
  %v1989 = vpop.f32.mrf.mxu0
  %v1990 = vadd.f32 %v1829, %v1989
  %1991 = vmatprep.mubr.bf16.mxu0 %v1235
  %1992 = vmatmul.mubr.bf16.gmra.mxu0 %v1036
  %v1993 = vpop.f32.mrf.mxu0
  %v1994 = vadd.f32 %v1833, %v1993
  %v1995 = vpop.f32.mrf.mxu0
  %v1996 = vadd.f32 %v1835, %v1995
  %v1997 = vpop.f32.mrf.mxu0
  %v1998 = vadd.f32 %v1837, %v1997
  %v1999 = vpop.f32.mrf.mxu0
  %v2000 = vadd.f32 %v1839, %v1999
  %2001 = vmatprep.mubr.bf16.mxu0 %v1238
  %2002 = vmatmul.mubr.bf16.gmra.mxu0 %v1046
  %v2003 = vpop.f32.mrf.mxu0
  %v2004 = vadd.f32 %v1843, %v2003
  %v2005 = vpop.f32.mrf.mxu0
  %v2006 = vadd.f32 %v1845, %v2005
  %v2007 = vpop.f32.mrf.mxu0
  %v2008 = vadd.f32 %v1847, %v2007
  %v2009 = vpop.f32.mrf.mxu0
  %v2010 = vadd.f32 %v1849, %v2009
  %2011 = vmatprep.mubr.bf16.mxu0 %v1241
  %2012 = vmatmul.mubr.bf16.gmra.mxu0 %v1056
  %v2013 = vpop.f32.mrf.mxu0
  %v2014 = vadd.f32 %v1853, %v2013
  %v2015 = vpop.f32.mrf.mxu0
  %v2016 = vadd.f32 %v1855, %v2015
  %v2017 = vpop.f32.mrf.mxu0
  %v2018 = vadd.f32 %v1857, %v2017
  %v2019 = vpop.f32.mrf.mxu0
  %v2020 = vadd.f32 %v1859, %v2019
  %2021 = vmatprep.mubr.bf16.mxu0 %v1244
  %2022 = vmatmul.mubr.bf16.gmra.mxu0 %v1066
  %v2023 = vpop.f32.mrf.mxu0
  %v2024 = vadd.f32 %v1863, %v2023
  %v2025 = vpop.f32.mrf.mxu0
  %v2026 = vadd.f32 %v1865, %v2025
  %v2027 = vpop.f32.mrf.mxu0
  %v2028 = vadd.f32 %v1867, %v2027
  %v2029 = vpop.f32.mrf.mxu0
  %v2030 = vadd.f32 %v1869, %v2029
  %2031 = vmatprep.mubr.bf16.mxu0 %v1247
  %2032 = vmatmul.mubr.bf16.gmra.mxu0 %v1076
  %v2033 = vpop.f32.mrf.mxu0
  %v2034 = vadd.f32 %v1873, %v2033
  %v2035 = vpop.f32.mrf.mxu0
  %v2036 = vadd.f32 %v1875, %v2035
  %v2037 = vpop.f32.mrf.mxu0
  %v2038 = vadd.f32 %v1877, %v2037
  %v2039 = vpop.f32.mrf.mxu0
  %v2040 = vadd.f32 %v1879, %v2039
  %2041 = vmatprep.mubr.bf16.mxu0 %v1250
  %2042 = vmatmul.mubr.bf16.gmra.mxu0 %v1086
  %v2043 = vpop.f32.mrf.mxu0
  %v2044 = vadd.f32 %v1883, %v2043
  %v2045 = vpop.f32.mrf.mxu0
  %v2046 = vadd.f32 %v1885, %v2045
  %v2047 = vpop.f32.mrf.mxu0
  %v2048 = vadd.f32 %v1887, %v2047
  %v2049 = vpop.f32.mrf.mxu0
  %v2050 = vadd.f32 %v1889, %v2049
  %2051 = vmatprep.mubr.bf16.mxu0 %v1253
  %2052 = vmatmul.mubr.bf16.gmra.mxu0 %v1096
  %v2053 = vpop.f32.mrf.mxu0
  %v2054 = vadd.f32 %v1893, %v2053
  %v2055 = vpop.f32.mrf.mxu0
  %v2056 = vadd.f32 %v1895, %v2055
  %v2057 = vpop.f32.mrf.mxu0
  %v2058 = vpop.f32.mrf.mxu0
  %2059 = vdwg.mxu0
  %vm2060 = vcmask 556032
  %v2061 = vsel %vm2060, %v1936, 0.0
  %v2062 = vadd.f32 %v1934, %v2061
  %2063 = vadd.xlane.f32.xlu0 %v2062
  %v2064 = vpop.xlane.xlu0 %2063
  %v2065 = vsel %vm2060, %v1940, 0.0
  %v2066 = vadd.f32 %v1938, %v2065
  %2067 = vadd.xlane.f32.xlu0 %v2066
  %v2068 = vpop.xlane.xlu0 %2067
  %v2069 = vsel %vm2060, %v1946, 0.0
  %v2070 = vadd.f32 %v1944, %v2069
  %2071 = vadd.xlane.f32.xlu0 %v2070
  %v2072 = vpop.xlane.xlu0 %2071
  %v2073 = vsel %vm2060, %v1950, 0.0
  %v2074 = vadd.f32 %v1948, %v2073
  %2075 = vadd.xlane.f32.xlu0 %v2074
  %v2076 = vpop.xlane.xlu0 %2075
  %v2077 = vsel %vm2060, %v1956, 0.0
  %v2078 = vadd.f32 %v1954, %v2077
  %2079 = vadd.xlane.f32.xlu0 %v2078
  %v2080 = vpop.xlane.xlu0 %2079
  %v2081 = vsel %vm2060, %v1960, 0.0
  %v2082 = vadd.f32 %v1958, %v2081
  %2083 = vadd.xlane.f32.xlu0 %v2082
  %v2084 = vpop.xlane.xlu0 %2083
  %v2085 = vsel %vm2060, %v1966, 0.0
  %v2086 = vadd.f32 %v1964, %v2085
  %2087 = vadd.xlane.f32.xlu0 %v2086
  %v2088 = vpop.xlane.xlu0 %2087
  %v2089 = vsel %vm2060, %v1970, 0.0
  %v2090 = vadd.f32 %v1968, %v2089
  %2091 = vadd.xlane.f32.xlu0 %v2090
  %v2092 = vpop.xlane.xlu0 %2091
  %v2093 = vsel %vm2060, %v1976, 0.0
  %v2094 = vadd.f32 %v1974, %v2093
  %2095 = vadd.xlane.f32.xlu0 %v2094
  %v2096 = vpop.xlane.xlu0 %2095
  %v2097 = vsel %vm2060, %v1980, 0.0
  %v2098 = vadd.f32 %v1978, %v2097
  %2099 = vadd.xlane.f32.xlu0 %v2098
  %v2100 = vpop.xlane.xlu0 %2099
  %v2101 = vsel %vm2060, %v1986, 0.0
  %v2102 = vadd.f32 %v1984, %v2101
  %2103 = vadd.xlane.f32.xlu0 %v2102
  %v2104 = vpop.xlane.xlu0 %2103
  %v2105 = vsel %vm2060, %v1990, 0.0
  %v2106 = vadd.f32 %v1988, %v2105
  %2107 = vadd.xlane.f32.xlu0 %v2106
  %v2108 = vpop.xlane.xlu0 %2107
  %v2109 = vsel %vm2060, %v1996, 0.0
  %v2110 = vadd.f32 %v1994, %v2109
  %2111 = vadd.xlane.f32.xlu0 %v2110
  %v2112 = vpop.xlane.xlu0 %2111
  %v2113 = vsel %vm2060, %v2000, 0.0
  %v2114 = vadd.f32 %v1998, %v2113
  %2115 = vadd.xlane.f32.xlu0 %v2114
  %v2116 = vpop.xlane.xlu0 %2115
  %v2117 = vsel %vm2060, %v2006, 0.0
  %v2118 = vadd.f32 %v2004, %v2117
  %2119 = vadd.xlane.f32.xlu0 %v2118
  %v2120 = vpop.xlane.xlu0 %2119
  %v2121 = vsel %vm2060, %v2010, 0.0
  %v2122 = vadd.f32 %v2008, %v2121
  %2123 = vadd.xlane.f32.xlu0 %v2122
  %v2124 = vpop.xlane.xlu0 %2123
  %v2125 = vsel %vm2060, %v2016, 0.0
  %v2126 = vadd.f32 %v2014, %v2125
  %2127 = vadd.xlane.f32.xlu0 %v2126
  %v2128 = vpop.xlane.xlu0 %2127
  %v2129 = vsel %vm2060, %v2020, 0.0
  %v2130 = vadd.f32 %v2018, %v2129
  %2131 = vadd.xlane.f32.xlu0 %v2130
  %v2132 = vpop.xlane.xlu0 %2131
  %v2133 = vsel %vm2060, %v2026, 0.0
  %v2134 = vadd.f32 %v2024, %v2133
  %2135 = vadd.xlane.f32.xlu0 %v2134
  %v2136 = vpop.xlane.xlu0 %2135
  %v2137 = vsel %vm2060, %v2030, 0.0
  %v2138 = vadd.f32 %v2028, %v2137
  %2139 = vadd.xlane.f32.xlu0 %v2138
  %v2140 = vpop.xlane.xlu0 %2139
  %v2141 = vsel %vm2060, %v2036, 0.0
  %v2142 = vadd.f32 %v2034, %v2141
  %2143 = vadd.xlane.f32.xlu0 %v2142
  %v2144 = vpop.xlane.xlu0 %2143
  %v2145 = vsel %vm2060, %v2040, 0.0
  %v2146 = vadd.f32 %v2038, %v2145
  %2147 = vadd.xlane.f32.xlu0 %v2146
  %v2148 = vpop.xlane.xlu0 %2147
  %v2149 = vsel %vm2060, %v2046, 0.0
  %v2150 = vadd.f32 %v2044, %v2149
  %2151 = vadd.xlane.f32.xlu0 %v2150
  %v2152 = vpop.xlane.xlu0 %2151
  %v2153 = vsel %vm2060, %v2050, 0.0
  %v2154 = vadd.f32 %v2048, %v2153
  %2155 = vadd.xlane.f32.xlu0 %v2154
  %v2156 = vpop.xlane.xlu0 %2155
  %v2157 = vsel %vm2060, %v2056, 0.0
  %v2158 = vadd.f32 %v2054, %v2157
  %2159 = vadd.xlane.f32.xlu0 %v2158
  %v2160 = vpop.xlane.xlu0 %2159
  %v2161 = vmul.f32 %v1934, %v1934
  %v2162 = vmul.f32 %v1936, %v1936
  %v2163 = vmul.f32 %v1938, %v1938
  %v2164 = vmul.f32 %v1940, %v1940
  %v2165 = vmul.f32 %v1944, %v1944
  %v2166 = vmul.f32 %v1946, %v1946
  %v2167 = vmul.f32 %v1948, %v1948
  %v2168 = vmul.f32 %v1950, %v1950
  %v2169 = vmul.f32 %v1954, %v1954
  %v2170 = vmul.f32 %v1956, %v1956
  %v2171 = vmul.f32 %v1958, %v1958
  %v2172 = vmul.f32 %v1960, %v1960
  %v2173 = vmul.f32 %v1964, %v1964
  %v2174 = vmul.f32 %v1966, %v1966
  %v2175 = vmul.f32 %v1968, %v1968
  %v2176 = vmul.f32 %v1970, %v1970
  %v2177 = vmul.f32 %v1974, %v1974
  %v2178 = vmul.f32 %v1976, %v1976
  %v2179 = vmul.f32 %v1978, %v1978
  %v2180 = vmul.f32 %v1980, %v1980
  %v2181 = vmul.f32 %v1984, %v1984
  %v2182 = vmul.f32 %v1986, %v1986
  %v2183 = vmul.f32 %v1988, %v1988
  %v2184 = vmul.f32 %v1990, %v1990
  %v2185 = vmul.f32 %v1994, %v1994
  %v2186 = vmul.f32 %v1996, %v1996
  %v2187 = vmul.f32 %v1998, %v1998
  %v2188 = vmul.f32 %v2000, %v2000
  %v2189 = vmul.f32 %v2004, %v2004
  %v2190 = vmul.f32 %v2006, %v2006
  %v2191 = vmul.f32 %v2008, %v2008
  %v2192 = vmul.f32 %v2010, %v2010
  %v2193 = vmul.f32 %v2014, %v2014
  %v2194 = vmul.f32 %v2016, %v2016
  %v2195 = vmul.f32 %v2018, %v2018
  %v2196 = vmul.f32 %v2020, %v2020
  %v2197 = vmul.f32 %v2024, %v2024
  %v2198 = vmul.f32 %v2026, %v2026
  %v2199 = vmul.f32 %v2028, %v2028
  %v2200 = vmul.f32 %v2030, %v2030
  %v2201 = vmul.f32 %v2034, %v2034
  %v2202 = vmul.f32 %v2036, %v2036
  %v2203 = vmul.f32 %v2038, %v2038
  %v2204 = vmul.f32 %v2040, %v2040
  %v2205 = vmul.f32 %v2044, %v2044
  %v2206 = vmul.f32 %v2046, %v2046
  %v2207 = vmul.f32 %v2048, %v2048
  %v2208 = vmul.f32 %v2050, %v2050
  %v2209 = vmul.f32 %v2054, %v2054
  %v2210 = vmul.f32 %v2056, %v2056
  %v2211 = vsel %vm2060, %v2162, 0.0
  %v2212 = vadd.f32 %v2161, %v2211
  %2213 = vadd.xlane.f32.xlu0 %v2212
  %v2214 = vpop.xlane.xlu0 %2213
  %v2215 = vsel %vm2060, %v2164, 0.0
  %v2216 = vadd.f32 %v2163, %v2215
  %2217 = vadd.xlane.f32.xlu0 %v2216
  %v2218 = vpop.xlane.xlu0 %2217
  %v2219 = vsel %vm2060, %v2166, 0.0
  %v2220 = vadd.f32 %v2165, %v2219
  %2221 = vadd.xlane.f32.xlu0 %v2220
  %v2222 = vpop.xlane.xlu0 %2221
  %v2223 = vsel %vm2060, %v2168, 0.0
  %v2224 = vadd.f32 %v2167, %v2223
  %2225 = vadd.xlane.f32.xlu0 %v2224
  %v2226 = vpop.xlane.xlu0 %2225
  %v2227 = vsel %vm2060, %v2170, 0.0
  %v2228 = vadd.f32 %v2169, %v2227
  %2229 = vadd.xlane.f32.xlu0 %v2228
  %v2230 = vpop.xlane.xlu0 %2229
  %v2231 = vsel %vm2060, %v2172, 0.0
  %v2232 = vadd.f32 %v2171, %v2231
  %2233 = vadd.xlane.f32.xlu0 %v2232
  %v2234 = vpop.xlane.xlu0 %2233
  %v2235 = vsel %vm2060, %v2174, 0.0
  %v2236 = vadd.f32 %v2173, %v2235
  %2237 = vadd.xlane.f32.xlu0 %v2236
  %v2238 = vpop.xlane.xlu0 %2237
  %v2239 = vsel %vm2060, %v2176, 0.0
  %v2240 = vadd.f32 %v2175, %v2239
  %2241 = vadd.xlane.f32.xlu0 %v2240
  %v2242 = vpop.xlane.xlu0 %2241
  %v2243 = vsel %vm2060, %v2178, 0.0
  %v2244 = vadd.f32 %v2177, %v2243
  %2245 = vadd.xlane.f32.xlu0 %v2244
  %v2246 = vpop.xlane.xlu0 %2245
  %v2247 = vsel %vm2060, %v2180, 0.0
  %v2248 = vadd.f32 %v2179, %v2247
  %2249 = vadd.xlane.f32.xlu0 %v2248
  %v2250 = vpop.xlane.xlu0 %2249
  %v2251 = vsel %vm2060, %v2182, 0.0
  %v2252 = vadd.f32 %v2181, %v2251
  %2253 = vadd.xlane.f32.xlu0 %v2252
  %v2254 = vpop.xlane.xlu0 %2253
  %v2255 = vsel %vm2060, %v2184, 0.0
  %v2256 = vadd.f32 %v2183, %v2255
  %2257 = vadd.xlane.f32.xlu0 %v2256
  %v2258 = vpop.xlane.xlu0 %2257
  %v2259 = vsel %vm2060, %v2186, 0.0
  %v2260 = vadd.f32 %v2185, %v2259
  %2261 = vadd.xlane.f32.xlu0 %v2260
  %v2262 = vpop.xlane.xlu0 %2261
  %v2263 = vsel %vm2060, %v2188, 0.0
  %v2264 = vadd.f32 %v2187, %v2263
  %2265 = vadd.xlane.f32.xlu0 %v2264
  %v2266 = vpop.xlane.xlu0 %2265
  %v2267 = vsel %vm2060, %v2190, 0.0
  %v2268 = vadd.f32 %v2189, %v2267
  %2269 = vadd.xlane.f32.xlu0 %v2268
  %v2270 = vpop.xlane.xlu0 %2269
  %v2271 = vsel %vm2060, %v2192, 0.0
  %v2272 = vadd.f32 %v2191, %v2271
  %2273 = vadd.xlane.f32.xlu0 %v2272
  %v2274 = vpop.xlane.xlu0 %2273
  %v2275 = vsel %vm2060, %v2194, 0.0
  %v2276 = vadd.f32 %v2193, %v2275
  %2277 = vadd.xlane.f32.xlu0 %v2276
  %v2278 = vpop.xlane.xlu0 %2277
  %v2279 = vsel %vm2060, %v2196, 0.0
  %v2280 = vadd.f32 %v2195, %v2279
  %2281 = vadd.xlane.f32.xlu0 %v2280
  %v2282 = vpop.xlane.xlu0 %2281
  %v2283 = vsel %vm2060, %v2198, 0.0
  %v2284 = vadd.f32 %v2197, %v2283
  %2285 = vadd.xlane.f32.xlu0 %v2284
  %v2286 = vpop.xlane.xlu0 %2285
  %v2287 = vsel %vm2060, %v2200, 0.0
  %v2288 = vadd.f32 %v2199, %v2287
  %2289 = vadd.xlane.f32.xlu0 %v2288
  %v2290 = vpop.xlane.xlu0 %2289
  %v2291 = vsel %vm2060, %v2202, 0.0
  %v2292 = vadd.f32 %v2201, %v2291
  %2293 = vadd.xlane.f32.xlu0 %v2292
  %v2294 = vpop.xlane.xlu0 %2293
  %v2295 = vsel %vm2060, %v2204, 0.0
  %v2296 = vadd.f32 %v2203, %v2295
  %2297 = vadd.xlane.f32.xlu0 %v2296
  %v2298 = vpop.xlane.xlu0 %2297
  %v2299 = vsel %vm2060, %v2206, 0.0
  %v2300 = vadd.f32 %v2205, %v2299
  %2301 = vadd.xlane.f32.xlu0 %v2300
  %v2302 = vpop.xlane.xlu0 %2301
  %v2303 = vsel %vm2060, %v2208, 0.0
  %v2304 = vadd.f32 %v2207, %v2303
  %2305 = vadd.xlane.f32.xlu0 %v2304
  %v2306 = vpop.xlane.xlu0 %2305
  %v2307 = vsel %vm2060, %v2210, 0.0
  %v2308 = vadd.f32 %v2209, %v2307
  %2309 = vadd.xlane.f32.xlu0 %v2308
  %v2310 = vpop.xlane.xlu0 %2309
  %v2311 = vrcp.pop 196.0
  %v2312 = vmul.f32 %v2064, %v2311
  %v2313 = vmul.f32 %v2068, %v2311
  %v2314 = vmul.f32 %v2072, %v2311
  %v2315 = vmul.f32 %v2076, %v2311
  %v2316 = vmul.f32 %v2080, %v2311
  %v2317 = vmul.f32 %v2084, %v2311
  %v2318 = vmul.f32 %v2088, %v2311
  %v2319 = vmul.f32 %v2092, %v2311
  %v2320 = vmul.f32 %v2096, %v2311
  %v2321 = vmul.f32 %v2100, %v2311
  %v2322 = vmul.f32 %v2104, %v2311
  %v2323 = vmul.f32 %v2108, %v2311
  %v2324 = vmul.f32 %v2112, %v2311
  %v2325 = vmul.f32 %v2116, %v2311
  %v2326 = vmul.f32 %v2120, %v2311
  %v2327 = vmul.f32 %v2124, %v2311
  %v2328 = vmul.f32 %v2128, %v2311
  %v2329 = vmul.f32 %v2132, %v2311
  %v2330 = vmul.f32 %v2136, %v2311
  %v2331 = vmul.f32 %v2140, %v2311
  %v2332 = vmul.f32 %v2144, %v2311
  %v2333 = vmul.f32 %v2148, %v2311
  %v2334 = vmul.f32 %v2152, %v2311
  %v2335 = vmul.f32 %v2156, %v2311
  %v2336 = vmul.f32 %v2160, %v2311
  %v2337 = vmul.f32 %v2214, %v2311
  %v2338 = vmul.f32 %v2218, %v2311
  %v2339 = vmul.f32 %v2222, %v2311
  %v2340 = vmul.f32 %v2226, %v2311
  %v2341 = vmul.f32 %v2230, %v2311
  %v2342 = vmul.f32 %v2234, %v2311
  %v2343 = vmul.f32 %v2238, %v2311
  %v2344 = vmul.f32 %v2242, %v2311
  %v2345 = vmul.f32 %v2246, %v2311
  %v2346 = vmul.f32 %v2250, %v2311
  %v2347 = vmul.f32 %v2254, %v2311
  %v2348 = vmul.f32 %v2258, %v2311
  %v2349 = vmul.f32 %v2262, %v2311
  %v2350 = vmul.f32 %v2266, %v2311
  %v2351 = vmul.f32 %v2270, %v2311
  %v2352 = vmul.f32 %v2274, %v2311
  %v2353 = vmul.f32 %v2278, %v2311
  %v2354 = vmul.f32 %v2282, %v2311
  %v2355 = vmul.f32 %v2286, %v2311
  %v2356 = vmul.f32 %v2290, %v2311
  %v2357 = vmul.f32 %v2294, %v2311
  %v2358 = vmul.f32 %v2298, %v2311
  %v2359 = vmul.f32 %v2302, %v2311
  %v2360 = vmul.f32 %v2306, %v2311
  %v2361 = vmul.f32 %v2310, %v2311
  %v2362 = vmul.f32 %v2312, %v2312
  %v2363 = vmul.f32 %v2313, %v2313
  %v2364 = vmul.f32 %v2314, %v2314
  %v2365 = vmul.f32 %v2315, %v2315
  %v2366 = vmul.f32 %v2316, %v2316
  %v2367 = vmul.f32 %v2317, %v2317
  %v2368 = vmul.f32 %v2318, %v2318
  %v2369 = vmul.f32 %v2319, %v2319
  %v2370 = vmul.f32 %v2320, %v2320
  %v2371 = vmul.f32 %v2321, %v2321
  %v2372 = vmul.f32 %v2322, %v2322
  %v2373 = vmul.f32 %v2323, %v2323
  %v2374 = vmul.f32 %v2324, %v2324
  %v2375 = vmul.f32 %v2325, %v2325
  %v2376 = vmul.f32 %v2326, %v2326
  %v2377 = vmul.f32 %v2327, %v2327
  %v2378 = vmul.f32 %v2328, %v2328
  %v2379 = vmul.f32 %v2329, %v2329
  %v2380 = vmul.f32 %v2330, %v2330
  %v2381 = vmul.f32 %v2331, %v2331
  %v2382 = vmul.f32 %v2332, %v2332
  %v2383 = vmul.f32 %v2333, %v2333
  %v2384 = vmul.f32 %v2334, %v2334
  %v2385 = vmul.f32 %v2335, %v2335
  %v2386 = vmul.f32 %v2336, %v2336
  %v2387 = vsub.f32 %v2337, %v2362
  %v2388 = vsub.f32 %v2338, %v2363
  %v2389 = vsub.f32 %v2339, %v2364
  %v2390 = vsub.f32 %v2340, %v2365
  %v2391 = vsub.f32 %v2341, %v2366
  %v2392 = vsub.f32 %v2342, %v2367
  %v2393 = vsub.f32 %v2343, %v2368
  %v2394 = vsub.f32 %v2344, %v2369
  %v2395 = vsub.f32 %v2345, %v2370
  %v2396 = vsub.f32 %v2346, %v2371
  %v2397 = vsub.f32 %v2347, %v2372
  %v2398 = vsub.f32 %v2348, %v2373
  %v2399 = vsub.f32 %v2349, %v2374
  %v2400 = vsub.f32 %v2350, %v2375
  %v2401 = vsub.f32 %v2351, %v2376
  %v2402 = vsub.f32 %v2352, %v2377
  %v2403 = vsub.f32 %v2353, %v2378
  %v2404 = vsub.f32 %v2354, %v2379
  %v2405 = vsub.f32 %v2355, %v2380
  %v2406 = vsub.f32 %v2356, %v2381
  %v2407 = vsub.f32 %v2357, %v2382
  %v2408 = vsub.f32 %v2358, %v2383
  %v2409 = vsub.f32 %v2359, %v2384
  %v2410 = vsub.f32 %v2360, %v2385
  %v2411 = vsub.f32 %v2361, %v2386
  %v2412 = vld [vmem:[%s2] sm:$0xff]
  %v2413 = vld [vmem:[%s2 + $0x8] sm:$0xff]
  %v2414 = vld [vmem:[%s2 + $0x10] sm:$0xff]
  %v2415 = vld [vmem:[%s2 + $0x18] sm:$0xff]
  %v2416 = vld [vmem:[%s2 + $0x20] sm:$0xff]
  %v2417 = vld [vmem:[%s2 + $0x28] sm:$0xff]
  %v2418 = vld [vmem:[%s2 + $0x30] sm:$0xff]
  %v2419 = vld [vmem:[%s2 + $0x38] sm:$0xff]
  %v2420 = vld [vmem:[%s2 + $0x40] sm:$0xff]
  %v2421 = vld [vmem:[%s2 + $0x48] sm:$0xff]
  %v2422 = vld [vmem:[%s2 + $0x50] sm:$0xff]
  %v2423 = vld [vmem:[%s2 + $0x58] sm:$0xff]
  %v2424 = vld [vmem:[%s2 + $0x60] sm:$0xff]
  %v2425 = vld [vmem:[%s2 + $0x68] sm:$0xff]
  %v2426 = vld [vmem:[%s2 + $0x70] sm:$0xff]
  %v2427 = vld [vmem:[%s2 + $0x78] sm:$0xff]
  %v2428 = vld [vmem:[%s2 + $0x80] sm:$0xff]
  %v2429 = vld [vmem:[%s2 + $0x88] sm:$0xff]
  %v2430 = vld [vmem:[%s2 + $0x90] sm:$0xff]
  %v2431 = vld [vmem:[%s2 + $0x98] sm:$0xff]
  %v2432 = vld [vmem:[%s2 + $0xa0] sm:$0xff]
  %v2433 = vld [vmem:[%s2 + $0xa8] sm:$0xff]
  %v2434 = vld [vmem:[%s2 + $0xb0] sm:$0xff]
  %v2435 = vld [vmem:[%s2 + $0xb8] sm:$0xff]
  %v2436 = vld [vmem:[%s2 + $0xc0] sm:$0xff]
  %v2437 = vadd.f32 %v2387, 1e-05
  %v2438 = vadd.f32 %v2388, 1e-05
  %v2439 = vadd.f32 %v2389, 1e-05
  %v2440 = vadd.f32 %v2390, 1e-05
  %v2441 = vadd.f32 %v2391, 1e-05
  %v2442 = vadd.f32 %v2392, 1e-05
  %v2443 = vadd.f32 %v2393, 1e-05
  %v2444 = vadd.f32 %v2394, 1e-05
  %v2445 = vadd.f32 %v2395, 1e-05
  %v2446 = vadd.f32 %v2396, 1e-05
  %v2447 = vadd.f32 %v2397, 1e-05
  %v2448 = vadd.f32 %v2398, 1e-05
  %v2449 = vadd.f32 %v2399, 1e-05
  %v2450 = vadd.f32 %v2400, 1e-05
  %v2451 = vadd.f32 %v2401, 1e-05
  %v2452 = vadd.f32 %v2402, 1e-05
  %v2453 = vadd.f32 %v2403, 1e-05
  %v2454 = vadd.f32 %v2404, 1e-05
  %v2455 = vadd.f32 %v2405, 1e-05
  %v2456 = vadd.f32 %v2406, 1e-05
  %v2457 = vadd.f32 %v2407, 1e-05
  %v2458 = vadd.f32 %v2408, 1e-05
  %v2459 = vadd.f32 %v2409, 1e-05
  %v2460 = vadd.f32 %v2410, 1e-05
  %v2461 = vadd.f32 %v2411, 1e-05
  %v2462 = vrsqrt.pop %v2437
  %v2463 = vrsqrt.pop %v2438
  %v2464 = vrsqrt.pop %v2439
  %v2465 = vrsqrt.pop %v2440
  %v2466 = vrsqrt.pop %v2441
  %v2467 = vrsqrt.pop %v2442
  %v2468 = vrsqrt.pop %v2443
  %v2469 = vrsqrt.pop %v2444
  %v2470 = vrsqrt.pop %v2445
  %v2471 = vrsqrt.pop %v2446
  %v2472 = vrsqrt.pop %v2447
  %v2473 = vrsqrt.pop %v2448
  %v2474 = vrsqrt.pop %v2449
  %v2475 = vrsqrt.pop %v2450
  %v2476 = vrsqrt.pop %v2451
  %v2477 = vrsqrt.pop %v2452
  %v2478 = vrsqrt.pop %v2453
  %v2479 = vrsqrt.pop %v2454
  %v2480 = vrsqrt.pop %v2455
  %v2481 = vrsqrt.pop %v2456
  %v2482 = vrsqrt.pop %v2457
  %v2483 = vrsqrt.pop %v2458
  %v2484 = vrsqrt.pop %v2459
  %v2485 = vrsqrt.pop %v2460
  %v2486 = vrsqrt.pop %v2461
  %v2487 = vmul.f32 %v2412, %v2462
  %v2488 = vmul.f32 %v2413, %v2463
  %v2489 = vmul.f32 %v2414, %v2464
  %v2490 = vmul.f32 %v2415, %v2465
  %v2491 = vmul.f32 %v2416, %v2466
  %v2492 = vmul.f32 %v2417, %v2467
  %v2493 = vmul.f32 %v2418, %v2468
  %v2494 = vmul.f32 %v2419, %v2469
  %v2495 = vmul.f32 %v2420, %v2470
  %v2496 = vmul.f32 %v2421, %v2471
  %v2497 = vmul.f32 %v2422, %v2472
  %v2498 = vmul.f32 %v2423, %v2473
  %v2499 = vmul.f32 %v2424, %v2474
  %v2500 = vmul.f32 %v2425, %v2475
  %v2501 = vmul.f32 %v2426, %v2476
  %v2502 = vmul.f32 %v2427, %v2477
  %v2503 = vmul.f32 %v2428, %v2478
  %v2504 = vmul.f32 %v2429, %v2479
  %v2505 = vmul.f32 %v2430, %v2480
  %v2506 = vmul.f32 %v2431, %v2481
  %v2507 = vmul.f32 %v2432, %v2482
  %v2508 = vmul.f32 %v2433, %v2483
  %v2509 = vmul.f32 %v2434, %v2484
  %v2510 = vmul.f32 %v2435, %v2485
  %v2511 = vmul.f32 %v2436, %v2486
  %v2512 = vld [vmem:[%s3] sm:$0xff]
  %v2513 = vld [vmem:[%s3 + $0x8] sm:$0xff]
  %v2514 = vld [vmem:[%s3 + $0x10] sm:$0xff]
  %v2515 = vld [vmem:[%s3 + $0x18] sm:$0xff]
  %v2516 = vld [vmem:[%s3 + $0x20] sm:$0xff]
  %v2517 = vld [vmem:[%s3 + $0x28] sm:$0xff]
  %v2518 = vld [vmem:[%s3 + $0x30] sm:$0xff]
  %v2519 = vld [vmem:[%s3 + $0x38] sm:$0xff]
  %v2520 = vld [vmem:[%s3 + $0x40] sm:$0xff]
  %v2521 = vld [vmem:[%s3 + $0x48] sm:$0xff]
  %v2522 = vld [vmem:[%s3 + $0x50] sm:$0xff]
  %v2523 = vld [vmem:[%s3 + $0x58] sm:$0xff]
  %v2524 = vld [vmem:[%s3 + $0x60] sm:$0xff]
  %v2525 = vld [vmem:[%s3 + $0x68] sm:$0xff]
  %v2526 = vld [vmem:[%s3 + $0x70] sm:$0xff]
  %v2527 = vld [vmem:[%s3 + $0x78] sm:$0xff]
  %v2528 = vld [vmem:[%s3 + $0x80] sm:$0xff]
  %v2529 = vld [vmem:[%s3 + $0x88] sm:$0xff]
  %v2530 = vld [vmem:[%s3 + $0x90] sm:$0xff]
  %v2531 = vld [vmem:[%s3 + $0x98] sm:$0xff]
  %v2532 = vld [vmem:[%s3 + $0xa0] sm:$0xff]
  %v2533 = vld [vmem:[%s3 + $0xa8] sm:$0xff]
  %v2534 = vld [vmem:[%s3 + $0xb0] sm:$0xff]
  %v2535 = vld [vmem:[%s3 + $0xb8] sm:$0xff]
  %v2536 = vld [vmem:[%s3 + $0xc0] sm:$0xff]
  %v2537 = vmul.f32 %v2312, %v2487
  %v2538 = vmul.f32 %v2313, %v2488
  %v2539 = vmul.f32 %v2314, %v2489
  %v2540 = vmul.f32 %v2315, %v2490
  %v2541 = vmul.f32 %v2316, %v2491
  %v2542 = vmul.f32 %v2317, %v2492
  %v2543 = vmul.f32 %v2318, %v2493
  %v2544 = vmul.f32 %v2319, %v2494
  %v2545 = vmul.f32 %v2320, %v2495
  %v2546 = vmul.f32 %v2321, %v2496
  %v2547 = vmul.f32 %v2322, %v2497
  %v2548 = vmul.f32 %v2323, %v2498
  %v2549 = vmul.f32 %v2324, %v2499
  %v2550 = vmul.f32 %v2325, %v2500
  %v2551 = vmul.f32 %v2326, %v2501
  %v2552 = vmul.f32 %v2327, %v2502
  %v2553 = vmul.f32 %v2328, %v2503
  %v2554 = vmul.f32 %v2329, %v2504
  %v2555 = vmul.f32 %v2330, %v2505
  %v2556 = vmul.f32 %v2331, %v2506
  %v2557 = vmul.f32 %v2332, %v2507
  %v2558 = vmul.f32 %v2333, %v2508
  %v2559 = vmul.f32 %v2334, %v2509
  %v2560 = vmul.f32 %v2335, %v2510
  %v2561 = vmul.f32 %v2336, %v2511
  %v2562 = vsub.f32 %v2512, %v2537
  %v2563 = vsub.f32 %v2513, %v2538
  %v2564 = vsub.f32 %v2514, %v2539
  %v2565 = vsub.f32 %v2515, %v2540
  %v2566 = vsub.f32 %v2516, %v2541
  %v2567 = vsub.f32 %v2517, %v2542
  %v2568 = vsub.f32 %v2518, %v2543
  %v2569 = vsub.f32 %v2519, %v2544
  %v2570 = vsub.f32 %v2520, %v2545
  %v2571 = vsub.f32 %v2521, %v2546
  %v2572 = vsub.f32 %v2522, %v2547
  %v2573 = vsub.f32 %v2523, %v2548
  %v2574 = vsub.f32 %v2524, %v2549
  %v2575 = vsub.f32 %v2525, %v2550
  %v2576 = vsub.f32 %v2526, %v2551
  %v2577 = vsub.f32 %v2527, %v2552
  %v2578 = vsub.f32 %v2528, %v2553
  %v2579 = vsub.f32 %v2529, %v2554
  %v2580 = vsub.f32 %v2530, %v2555
  %v2581 = vsub.f32 %v2531, %v2556
  %v2582 = vsub.f32 %v2532, %v2557
  %v2583 = vsub.f32 %v2533, %v2558
  %v2584 = vsub.f32 %v2534, %v2559
  %v2585 = vsub.f32 %v2535, %v2560
  %v2586 = vsub.f32 %v2536, %v2561
  %2588 = vset.pattern.permute.xlu0 0
  %2589 = vperm.xlu0 %2588, %v2487
  %v2590 = vpop.permute.xlu0 %2589
  %2593 = vset.pattern.permute.xlu0 0
  %2594 = vperm.xlu0 %2593, %v2488
  %v2595 = vpop.permute.xlu0 %2594
  %2598 = vset.pattern.permute.xlu0 0
  %2599 = vperm.xlu0 %2598, %v2489
  %v2600 = vpop.permute.xlu0 %2599
  %2603 = vset.pattern.permute.xlu0 0
  %2604 = vperm.xlu0 %2603, %v2490
  %v2605 = vpop.permute.xlu0 %2604
  %2608 = vset.pattern.permute.xlu0 0
  %2609 = vperm.xlu0 %2608, %v2491
  %v2610 = vpop.permute.xlu0 %2609
  %2613 = vset.pattern.permute.xlu0 0
  %2614 = vperm.xlu0 %2613, %v2492
  %v2615 = vpop.permute.xlu0 %2614
  %2618 = vset.pattern.permute.xlu0 0
  %2619 = vperm.xlu0 %2618, %v2493
  %v2620 = vpop.permute.xlu0 %2619
  %2623 = vset.pattern.permute.xlu0 0
  %2624 = vperm.xlu0 %2623, %v2494
  %v2625 = vpop.permute.xlu0 %2624
  %2628 = vset.pattern.permute.xlu0 0
  %2629 = vperm.xlu0 %2628, %v2495
  %v2630 = vpop.permute.xlu0 %2629
  %2633 = vset.pattern.permute.xlu0 0
  %2634 = vperm.xlu0 %2633, %v2496
  %v2635 = vpop.permute.xlu0 %2634
  %2638 = vset.pattern.permute.xlu0 0
  %2639 = vperm.xlu0 %2638, %v2497
  %v2640 = vpop.permute.xlu0 %2639
  %2643 = vset.pattern.permute.xlu0 0
  %2644 = vperm.xlu0 %2643, %v2498
  %v2645 = vpop.permute.xlu0 %2644
  %2648 = vset.pattern.permute.xlu0 0
  %2649 = vperm.xlu0 %2648, %v2499
  %v2650 = vpop.permute.xlu0 %2649
  %2653 = vset.pattern.permute.xlu0 0
  %2654 = vperm.xlu0 %2653, %v2500
  %v2655 = vpop.permute.xlu0 %2654
  %2658 = vset.pattern.permute.xlu0 0
  %2659 = vperm.xlu0 %2658, %v2501
  %v2660 = vpop.permute.xlu0 %2659
  %2663 = vset.pattern.permute.xlu0 0
  %2664 = vperm.xlu0 %2663, %v2502
  %v2665 = vpop.permute.xlu0 %2664
  %2668 = vset.pattern.permute.xlu0 0
  %2669 = vperm.xlu0 %2668, %v2503
  %v2670 = vpop.permute.xlu0 %2669
  %2673 = vset.pattern.permute.xlu0 0
  %2674 = vperm.xlu0 %2673, %v2504
  %v2675 = vpop.permute.xlu0 %2674
  %2678 = vset.pattern.permute.xlu0 0
  %2679 = vperm.xlu0 %2678, %v2505
  %v2680 = vpop.permute.xlu0 %2679
  %2683 = vset.pattern.permute.xlu0 0
  %2684 = vperm.xlu0 %2683, %v2506
  %v2685 = vpop.permute.xlu0 %2684
  %2688 = vset.pattern.permute.xlu0 0
  %2689 = vperm.xlu0 %2688, %v2507
  %v2690 = vpop.permute.xlu0 %2689
  %2693 = vset.pattern.permute.xlu0 0
  %2694 = vperm.xlu0 %2693, %v2508
  %v2695 = vpop.permute.xlu0 %2694
  %2698 = vset.pattern.permute.xlu0 0
  %2699 = vperm.xlu0 %2698, %v2509
  %v2700 = vpop.permute.xlu0 %2699
  %2703 = vset.pattern.permute.xlu0 0
  %2704 = vperm.xlu0 %2703, %v2510
  %v2705 = vpop.permute.xlu0 %2704
  %2708 = vset.pattern.permute.xlu0 0
  %2709 = vperm.xlu0 %2708, %v2511
  %v2710 = vpop.permute.xlu0 %2709
  %v2712 = vmul.f32 %v1934, %v2590
  %v2713 = vmul.f32 %v1936, %v2590
  %v2714 = vmul.f32 %v1938, %v2595
  %v2715 = vmul.f32 %v1940, %v2595
  %v2716 = vmul.f32 %v1944, %v2600
  %v2717 = vmul.f32 %v1946, %v2600
  %v2718 = vmul.f32 %v1948, %v2605
  %v2719 = vmul.f32 %v1950, %v2605
  %v2720 = vmul.f32 %v1954, %v2610
  %v2721 = vmul.f32 %v1956, %v2610
  %v2722 = vmul.f32 %v1958, %v2615
  %v2723 = vmul.f32 %v1960, %v2615
  %v2724 = vmul.f32 %v1964, %v2620
  %v2725 = vmul.f32 %v1966, %v2620
  %v2726 = vmul.f32 %v1968, %v2625
  %v2727 = vmul.f32 %v1970, %v2625
  %v2728 = vmul.f32 %v1974, %v2630
  %v2729 = vmul.f32 %v1976, %v2630
  %v2730 = vmul.f32 %v1978, %v2635
  %v2731 = vmul.f32 %v1980, %v2635
  %v2732 = vmul.f32 %v1984, %v2640
  %v2733 = vmul.f32 %v1986, %v2640
  %v2734 = vmul.f32 %v1988, %v2645
  %v2735 = vmul.f32 %v1990, %v2645
  %v2736 = vmul.f32 %v1994, %v2650
  %v2737 = vmul.f32 %v1996, %v2650
  %v2738 = vmul.f32 %v1998, %v2655
  %v2739 = vmul.f32 %v2000, %v2655
  %v2740 = vmul.f32 %v2004, %v2660
  %v2741 = vmul.f32 %v2006, %v2660
  %v2742 = vmul.f32 %v2008, %v2665
  %v2743 = vmul.f32 %v2010, %v2665
  %v2744 = vmul.f32 %v2014, %v2670
  %v2745 = vmul.f32 %v2016, %v2670
  %v2746 = vmul.f32 %v2018, %v2675
  %v2747 = vmul.f32 %v2020, %v2675
  %v2748 = vmul.f32 %v2024, %v2680
  %v2749 = vmul.f32 %v2026, %v2680
  %v2750 = vmul.f32 %v2028, %v2685
  %v2751 = vmul.f32 %v2030, %v2685
  %v2752 = vmul.f32 %v2034, %v2690
  %v2753 = vmul.f32 %v2036, %v2690
  %v2754 = vmul.f32 %v2038, %v2695
  %v2755 = vmul.f32 %v2040, %v2695
  %v2756 = vmul.f32 %v2044, %v2700
  %v2757 = vmul.f32 %v2046, %v2700
  %v2758 = vmul.f32 %v2048, %v2705
  %v2759 = vmul.f32 %v2050, %v2705
  %v2760 = vmul.f32 %v2054, %v2710
  %v2761 = vmul.f32 %v2056, %v2710
  %2763 = vset.pattern.permute.xlu0 0
  %2764 = vperm.xlu0 %2763, %v2562
  %v2765 = vpop.permute.xlu0 %2764
  %2768 = vset.pattern.permute.xlu0 0
  %2769 = vperm.xlu0 %2768, %v2563
  %v2770 = vpop.permute.xlu0 %2769
  %2773 = vset.pattern.permute.xlu0 0
  %2774 = vperm.xlu0 %2773, %v2564
  %v2775 = vpop.permute.xlu0 %2774
  %2778 = vset.pattern.permute.xlu0 0
  %2779 = vperm.xlu0 %2778, %v2565
  %v2780 = vpop.permute.xlu0 %2779
  %2783 = vset.pattern.permute.xlu0 0
  %2784 = vperm.xlu0 %2783, %v2566
  %v2785 = vpop.permute.xlu0 %2784
  %2788 = vset.pattern.permute.xlu0 0
  %2789 = vperm.xlu0 %2788, %v2567
  %v2790 = vpop.permute.xlu0 %2789
  %2793 = vset.pattern.permute.xlu0 0
  %2794 = vperm.xlu0 %2793, %v2568
  %v2795 = vpop.permute.xlu0 %2794
  %2798 = vset.pattern.permute.xlu0 0
  %2799 = vperm.xlu0 %2798, %v2569
  %v2800 = vpop.permute.xlu0 %2799
  %2803 = vset.pattern.permute.xlu0 0
  %2804 = vperm.xlu0 %2803, %v2570
  %v2805 = vpop.permute.xlu0 %2804
  %2808 = vset.pattern.permute.xlu0 0
  %2809 = vperm.xlu0 %2808, %v2571
  %v2810 = vpop.permute.xlu0 %2809
  %2813 = vset.pattern.permute.xlu0 0
  %2814 = vperm.xlu0 %2813, %v2572
  %v2815 = vpop.permute.xlu0 %2814
  %2818 = vset.pattern.permute.xlu0 0
  %2819 = vperm.xlu0 %2818, %v2573
  %v2820 = vpop.permute.xlu0 %2819
  %2823 = vset.pattern.permute.xlu0 0
  %2824 = vperm.xlu0 %2823, %v2574
  %v2825 = vpop.permute.xlu0 %2824
  %2828 = vset.pattern.permute.xlu0 0
  %2829 = vperm.xlu0 %2828, %v2575
  %v2830 = vpop.permute.xlu0 %2829
  %2833 = vset.pattern.permute.xlu0 0
  %2834 = vperm.xlu0 %2833, %v2576
  %v2835 = vpop.permute.xlu0 %2834
  %2838 = vset.pattern.permute.xlu0 0
  %2839 = vperm.xlu0 %2838, %v2577
  %v2840 = vpop.permute.xlu0 %2839
  %2843 = vset.pattern.permute.xlu0 0
  %2844 = vperm.xlu0 %2843, %v2578
  %v2845 = vpop.permute.xlu0 %2844
  %2848 = vset.pattern.permute.xlu0 0
  %2849 = vperm.xlu0 %2848, %v2579
  %v2850 = vpop.permute.xlu0 %2849
  %2853 = vset.pattern.permute.xlu0 0
  %2854 = vperm.xlu0 %2853, %v2580
  %v2855 = vpop.permute.xlu0 %2854
  %2858 = vset.pattern.permute.xlu0 0
  %2859 = vperm.xlu0 %2858, %v2581
  %v2860 = vpop.permute.xlu0 %2859
  %2863 = vset.pattern.permute.xlu0 0
  %2864 = vperm.xlu0 %2863, %v2582
  %v2865 = vpop.permute.xlu0 %2864
  %2868 = vset.pattern.permute.xlu0 0
  %2869 = vperm.xlu0 %2868, %v2583
  %v2870 = vpop.permute.xlu0 %2869
  %2873 = vset.pattern.permute.xlu0 0
  %2874 = vperm.xlu0 %2873, %v2584
  %v2875 = vpop.permute.xlu0 %2874
  %2878 = vset.pattern.permute.xlu0 0
  %2879 = vperm.xlu0 %2878, %v2585
  %v2880 = vpop.permute.xlu0 %2879
  %2883 = vset.pattern.permute.xlu0 0
  %2884 = vperm.xlu0 %2883, %v2586
  %v2885 = vpop.permute.xlu0 %2884
  %v2887 = vadd.f32 %v2712, %v2765
  %v2888 = vadd.f32 %v2713, %v2765
  %v2889 = vadd.f32 %v2714, %v2770
  %v2890 = vadd.f32 %v2715, %v2770
  %v2891 = vadd.f32 %v2716, %v2775
  %v2892 = vadd.f32 %v2717, %v2775
  %v2893 = vadd.f32 %v2718, %v2780
  %v2894 = vadd.f32 %v2719, %v2780
  %v2895 = vadd.f32 %v2720, %v2785
  %v2896 = vadd.f32 %v2721, %v2785
  %v2897 = vadd.f32 %v2722, %v2790
  %v2898 = vadd.f32 %v2723, %v2790
  %v2899 = vadd.f32 %v2724, %v2795
  %v2900 = vadd.f32 %v2725, %v2795
  %v2901 = vadd.f32 %v2726, %v2800
  %v2902 = vadd.f32 %v2727, %v2800
  %v2903 = vadd.f32 %v2728, %v2805
  %v2904 = vadd.f32 %v2729, %v2805
  %v2905 = vadd.f32 %v2730, %v2810
  %v2906 = vadd.f32 %v2731, %v2810
  %v2907 = vadd.f32 %v2732, %v2815
  %v2908 = vadd.f32 %v2733, %v2815
  %v2909 = vadd.f32 %v2734, %v2820
  %v2910 = vadd.f32 %v2735, %v2820
  %v2911 = vadd.f32 %v2736, %v2825
  %v2912 = vadd.f32 %v2737, %v2825
  %v2913 = vadd.f32 %v2738, %v2830
  %v2914 = vadd.f32 %v2739, %v2830
  %v2915 = vadd.f32 %v2740, %v2835
  %v2916 = vadd.f32 %v2741, %v2835
  %v2917 = vadd.f32 %v2742, %v2840
  %v2918 = vadd.f32 %v2743, %v2840
  %v2919 = vadd.f32 %v2744, %v2845
  %v2920 = vadd.f32 %v2745, %v2845
  %v2921 = vadd.f32 %v2746, %v2850
  %v2922 = vadd.f32 %v2747, %v2850
  %v2923 = vadd.f32 %v2748, %v2855
  %v2924 = vadd.f32 %v2749, %v2855
  %v2925 = vadd.f32 %v2750, %v2860
  %v2926 = vadd.f32 %v2751, %v2860
  %v2927 = vadd.f32 %v2752, %v2865
  %v2928 = vadd.f32 %v2753, %v2865
  %v2929 = vadd.f32 %v2754, %v2870
  %v2930 = vadd.f32 %v2755, %v2870
  %v2931 = vadd.f32 %v2756, %v2875
  %v2932 = vadd.f32 %v2757, %v2875
  %v2933 = vadd.f32 %v2758, %v2880
  %v2934 = vadd.f32 %v2759, %v2880
  %v2935 = vadd.f32 %v2760, %v2885
  %v2936 = vadd.f32 %v2761, %v2885
  %2937 = vst [vmem:[%s4] sm:$0xff] %v2887
  %2938 = vst.msk [vmem:[%s4 + $0x8] sm:$0xff] %vm2060, %v2888
  %2939 = vst [vmem:[%s4 + $0x10] sm:$0xff] %v2889
  %2940 = vst.msk [vmem:[%s4 + $0x18] sm:$0xff] %vm2060, %v2890
  %2941 = vst [vmem:[%s4 + $0x20] sm:$0xff] %v2891
  %2942 = vst.msk [vmem:[%s4 + $0x28] sm:$0xff] %vm2060, %v2892
  %2943 = vst [vmem:[%s4 + $0x30] sm:$0xff] %v2893
  %2944 = vst.msk [vmem:[%s4 + $0x38] sm:$0xff] %vm2060, %v2894
  %2945 = vst [vmem:[%s4 + $0x40] sm:$0xff] %v2895
  %2946 = vst.msk [vmem:[%s4 + $0x48] sm:$0xff] %vm2060, %v2896
  %2947 = vst [vmem:[%s4 + $0x50] sm:$0xff] %v2897
  %2948 = vst.msk [vmem:[%s4 + $0x58] sm:$0xff] %vm2060, %v2898
  %2949 = vst [vmem:[%s4 + $0x60] sm:$0xff] %v2899
  %2950 = vst.msk [vmem:[%s4 + $0x68] sm:$0xff] %vm2060, %v2900
  %2951 = vst [vmem:[%s4 + $0x70] sm:$0xff] %v2901
  %2952 = vst.msk [vmem:[%s4 + $0x78] sm:$0xff] %vm2060, %v2902
  %2953 = vst [vmem:[%s4 + $0x80] sm:$0xff] %v2903
  %2954 = vst.msk [vmem:[%s4 + $0x88] sm:$0xff] %vm2060, %v2904
  %2955 = vst [vmem:[%s4 + $0x90] sm:$0xff] %v2905
  %2956 = vst.msk [vmem:[%s4 + $0x98] sm:$0xff] %vm2060, %v2906
  %2957 = vst [vmem:[%s4 + $0xa0] sm:$0xff] %v2907
  %2958 = vst.msk [vmem:[%s4 + $0xa8] sm:$0xff] %vm2060, %v2908
  %2959 = vst [vmem:[%s4 + $0xb0] sm:$0xff] %v2909
  %2960 = vst.msk [vmem:[%s4 + $0xb8] sm:$0xff] %vm2060, %v2910
  %2961 = vst [vmem:[%s4 + $0xc0] sm:$0xff] %v2911
  %2962 = vst.msk [vmem:[%s4 + $0xc8] sm:$0xff] %vm2060, %v2912
  %2963 = vst [vmem:[%s4 + $0xd0] sm:$0xff] %v2913
  %2964 = vst.msk [vmem:[%s4 + $0xd8] sm:$0xff] %vm2060, %v2914
  %2965 = vst [vmem:[%s4 + $0xe0] sm:$0xff] %v2915
  %2966 = vst.msk [vmem:[%s4 + $0xe8] sm:$0xff] %vm2060, %v2916
  %2967 = vst [vmem:[%s4 + $0xf0] sm:$0xff] %v2917
  %2968 = vst.msk [vmem:[%s4 + $0xf8] sm:$0xff] %vm2060, %v2918
  %2969 = vst [vmem:[%s4 + $0x100] sm:$0xff] %v2919
  %2970 = vst.msk [vmem:[%s4 + $0x108] sm:$0xff] %vm2060, %v2920
  %2971 = vst [vmem:[%s4 + $0x110] sm:$0xff] %v2921
  %2972 = vst.msk [vmem:[%s4 + $0x118] sm:$0xff] %vm2060, %v2922
  %2973 = vst [vmem:[%s4 + $0x120] sm:$0xff] %v2923
  %2974 = vst.msk [vmem:[%s4 + $0x128] sm:$0xff] %vm2060, %v2924
  %2975 = vst [vmem:[%s4 + $0x130] sm:$0xff] %v2925
  %2976 = vst.msk [vmem:[%s4 + $0x138] sm:$0xff] %vm2060, %v2926
  %2977 = vst [vmem:[%s4 + $0x140] sm:$0xff] %v2927
  %2978 = vst.msk [vmem:[%s4 + $0x148] sm:$0xff] %vm2060, %v2928
  %2979 = vst [vmem:[%s4 + $0x150] sm:$0xff] %v2929
  %2980 = vst.msk [vmem:[%s4 + $0x158] sm:$0xff] %vm2060, %v2930
  %2981 = vst [vmem:[%s4 + $0x160] sm:$0xff] %v2931
  %2982 = vst.msk [vmem:[%s4 + $0x168] sm:$0xff] %vm2060, %v2932
  %2983 = vst [vmem:[%s4 + $0x170] sm:$0xff] %v2933
  %2984 = vst.msk [vmem:[%s4 + $0x178] sm:$0xff] %vm2060, %v2934
  %2985 = vst [vmem:[%s4 + $0x180] sm:$0xff] %v2935
  %2986 = vst.msk [vmem:[%s4 + $0x188] sm:$0xff] %vm2060, %v2936
  // Predicated region
  $region18: #{conv1x1_batchnorm.1} parent=0 // pred_check
    _
  $region19: #{conv1x1_batchnorm.1} parent=0 // pred_check_branch
    %2988 = sbr.rel (0) target = $region21
  $region20: #{conv1x1_batchnorm.1} parent=0 // pred_region
    _
  $region21: #{conv1x1_batchnorm.1} parent=0 // pred_fallthru
    _
  // Predicated region
  $region22: #{conv1x1_batchnorm.1} parent=0 // pred_check
    _
  $region23: #{conv1x1_batchnorm.1} parent=0 // pred_check_branch
    %2990 = sbr.rel (0) target = $region25
  $region24: #{conv1x1_batchnorm.1} parent=0 // pred_region
    _
  $region25: #{conv1x1_batchnorm.1} parent=0 // pred_fallthru
    _

</llo_original>
